<compile_context>
chip_gen: v7x
topology: tpu7x:2x2x1
jax: 0.10.0
libtpu: 0.0.40
codegen_flags: <defaults>
</compile_context>

<pallas_src>
import functools

import jax
import jax.numpy as jnp
from jax.experimental import pallas as pl
from jax.experimental.pallas import tpu as pltpu

_BN_EPS = 1e-5
_LRELU_SLOPE = 0.01
_DROP_P = 0.2
_KEEP_SCALE = 1.0 / (1.0 - _DROP_P)
_DROP_THRESH24 = int(_DROP_P * (1 << 24))   # integer threshold on 24 random bits


# ----------------------------------------------------------------------------
# helpers
# ----------------------------------------------------------------------------
def _hash_u32(x):
    # splitmix32-style finalizer: pure VPU integer ops, no pltpu PRNG needed.
    x = x ^ (x >> 16)
    x = x * jnp.uint32(0x7FEB352D)
    x = x ^ (x >> 15)
    x = x * jnp.uint32(0x846CA68B)
    x = x ^ (x >> 16)
    return x


def _pad_hw(t, H, W, C, dtype):
    """Zero-pad a VMEM-resident (H, W, C) tile to (H+2, W+2, C) — no HBM copy."""
    zc = jnp.zeros((H, 1, C), dtype)
    t = jnp.concatenate([zc, t, zc], axis=1)            # (H, W+2, C)
    zr = jnp.zeros((1, W + 2, C), dtype)
    return jnp.concatenate([zr, t, zr], axis=0)          # (H+2, W+2, C)


def _im2col_slab(xp, H, W, C):
    """(H+2, W+2, C) padded tile -> (H*W, 9*C) bf16 slab (K-folded im2col)."""
    cols = []
    for dy in range(3):
        for dx in range(3):
            cols.append(xp[dy:dy + H, dx:dx + W, :].reshape(H * W, C))
    return jnp.concatenate(cols, axis=-1)


def _vmem_limit_bytes():
    # Generation-aware: ~36 MiB on v7x (64 MiB physical), up to 100 MiB on v5e/v6e (128 MiB).
    cap = 64 * 1024 * 1024
    try:
        info = pltpu.get_tpu_info()
        cap = int(getattr(info, "vmem_capacity_bytes", cap) or cap)
    except Exception:
        pass
    return int(min(max(cap - 28 * 1024 * 1024, 32 * 1024 * 1024), 100 * 1024 * 1024))


def _conv_compiler_params():
    return pltpu.CompilerParams(
        dimension_semantics=("parallel",),
        vmem_limit_bytes=_vmem_limit_bytes(),
    )


# ----------------------------------------------------------------------------
# Kernel 1: conv1 & conv3 in one pass (shared input read, single K=9*Cin matmul)
#           + per-image per-channel sum / sumsq for both BatchNorms
# ----------------------------------------------------------------------------
def _conv13_kernel(x_ref, w_ref, y_ref, stats_ref):
    xt = x_ref[0]                                   # (H, W, Cin) bf16, in VMEM
    H, W, cin = xt.shape
    c2 = w_ref.shape[-1]                            # 2*C

    xp = _pad_hw(xt, H, W, cin, xt.dtype)           # pad in VMEM (no HBM padded copy)
    slab = _im2col_slab(xp, H, W, cin)              # (H*W, 9*Cin) bf16
    acc = jnp.dot(slab, w_ref[...], preferred_element_type=jnp.float32)   # (H*W, 2C)

    # Combined 2C-wide slab, bf16 writeback (conv1 cols [:C], conv3 cols [C:]).
    # No biases: a per-channel bias is exactly cancelled by batch-stat BN mean subtraction.
    y_ref[0] = acc.astype(y_ref.dtype)

    s = jnp.sum(acc, axis=0, keepdims=True)                     # (1, 2C)
    ss = jnp.sum(acc * acc, axis=0, keepdims=True)              # (1, 2C)
    stats_ref[0] = jnp.concatenate(
        [s, ss, jnp.zeros((6, c2), jnp.float32)], axis=0)


# ----------------------------------------------------------------------------
# Kernel 2: fully fused tail
#   BN1 affine + LeakyReLU + Dropout(p=0.2) + pad-in-VMEM + conv2 (single K=9*C
#   matmul) + bias + bn3(residual) affine + residual add
# ----------------------------------------------------------------------------
def _conv2_fused_kernel(y13_ref, w2_ref, b2_ref, sc_ref, sh_ref, o_ref,
                        *, seed_const, H, W):
    HW, c2 = y13_ref.shape[1], y13_ref.shape[2]
    C = c2 // 2

    # BN1 and BN3 affine applied to the whole 2C-wide slab in one VPU pass.
    ybn = y13_ref[0].astype(jnp.float32) * sc_ref[...] + sh_ref[...]       # (HW, 2C)
    h = ybn[:, :C]                                   # BN1(conv1(x))
    resid = ybn[:, C:]                               # BN3(conv3(x))

    # leaky_relu + dropout on the conv2 branch.
    h = jnp.where(h >= 0, h, _LRELU_SLOPE * h)
    n = pl.program_id(0)
    row = jax.lax.broadcasted_iota(jnp.int32, (HW, C), 0) + n * HW
    col = jax.lax.broadcasted_iota(jnp.int32, (HW, C), 1)
    idx = (row * C + col).astype(jnp.uint32)         # global element index -> tile-invariant
    bits = _hash_u32(idx ^ jnp.uint32(seed_const))
    keep = (bits >> 8).astype(jnp.int32) >= _DROP_THRESH24      # P(keep) = 0.8
    # TODO(synk): dropout mask is a counter-based hash, not torch's RNG stream.
    h = jnp.where(keep, h * jnp.float32(_KEEP_SCALE), jnp.float32(0.0))

    # conv2: pad in VMEM, one K=9*C MXU matmul.
    ht = h.astype(jnp.bfloat16).reshape(H, W, C)
    hp = _pad_hw(ht, H, W, C, jnp.bfloat16)
    slab = _im2col_slab(hp, H, W, C)                 # (HW, 9*C) bf16
    acc = jnp.dot(slab, w2_ref[...], preferred_element_type=jnp.float32)   # (HW, C)

    o_ref[0] = acc + b2_ref[...] + resid             # + conv2 bias + residual


# ----------------------------------------------------------------------------
# Wrapper
# ----------------------------------------------------------------------------
def in_block_forward(x_nchw, params, seed=0):
    N, Cin, H, W = x_nchw.shape
    C = params["w1"].shape[-1]
    M = N * H * W
    HW = H * W

    # NCHW -> NHWC and bf16 cast fused into one XLA pass (half the HBM of an f32 copy).
    x = jnp.transpose(x_nchw, (0, 2, 3, 1)).astype(jnp.bfloat16)

    # conv1 & conv3 weights folded to a single (9*Cin, 2C) matmul operand.
    w13 = jnp.concatenate([params["w1"], params["w3"]], axis=-1)
    w13 = w13.reshape(9 * Cin, 2 * C).astype(jnp.bfloat16)

    # ---- stage 1: conv1 & conv3, one pass over x ----
    # TODO(synk): for very large images add H-tiling with a 1-row halo (grid=(N, H//th))
    # so whole-image blocks are not required to fit v7x's 64 MiB VMEM.
    y13, stats = pl.pallas_call(
        _conv13_kernel,
        grid=(N,),
        in_specs=[
            pl.BlockSpec((1, H, W, Cin), lambda n: (n, 0, 0, 0)),
            pl.BlockSpec((9 * Cin, 2 * C), lambda n: (0, 0)),
        ],
        out_specs=[
            pl.BlockSpec((1, HW, 2 * C), lambda n: (n, 0, 0)),
            pl.BlockSpec((1, 8, 2 * C), lambda n: (n, 0, 0)),
        ],
        out_shape=[
            jax.ShapeDtypeStruct((N, HW, 2 * C), jnp.bfloat16),
            jax.ShapeDtypeStruct((N, 8, 2 * C), jnp.float32),
        ],
        compiler_params=_conv_compiler_params(),
    )(x, w13)

    # ---- tiny per-channel stat reduction -> BN affine coefficients (exact batch stats) ----
    s = jnp.sum(stats[:, 0, :], axis=0)
    ss = jnp.sum(stats[:, 1, :], axis=0)
    mean = s / M
    var = jnp.maximum(ss / M - mean * mean, 0.0)     # biased var, clamped (f32 cancellation)
    inv = jax.lax.rsqrt(var + _BN_EPS)
    gamma = jnp.concatenate([params["g1"], params["g3"]])
    beta = jnp.concatenate([params["be1"], params["be3"]])
    scale = gamma * inv
    shift = beta - mean * scale
    scale2c = scale.reshape(1, 2 * C).astype(jnp.float32)
    shift2c = shift.reshape(1, 2 * C).astype(jnp.float32)

    # ---- stage 2: BN1 + lrelu + dropout + conv2 + bias + bn3(residual) + add, one pass ----
    seed_const = (int(seed) * 0x9E3779B9 + 0x85EBCA6B) & 0xFFFFFFFF
    w2f = params["w2"].reshape(9 * C, C).astype(jnp.bfloat16)
    out = pl.pallas_call(
        functools.partial(_conv2_fused_kernel, seed_const=seed_const, H=H, W=W),
        grid=(N,),
        in_specs=[
            pl.BlockSpec((1, HW, 2 * C), lambda n: (n, 0, 0)),
            pl.BlockSpec((9 * C, C), lambda n: (0, 0)),
            pl.BlockSpec((1, C), lambda n: (0, 0)),
            pl.BlockSpec((1, 2 * C), lambda n: (0, 0)),
            pl.BlockSpec((1, 2 * C), lambda n: (0, 0)),
        ],
        out_specs=pl.BlockSpec((1, HW, C), lambda n: (n, 0, 0)),
        out_shape=jax.ShapeDtypeStruct((N, HW, C), jnp.float32),
        compiler_params=_conv_compiler_params(),
    )(y13, w2f, params["b2"].reshape(1, C).astype(jnp.float32), scale2c, shift2c)

    out = out.reshape(N, H, W, C)
    return jnp.transpose(out, (0, 3, 1, 2))          # NHWC -> NCHW (glue)


# ----------------------------------------------------------------------------
# Deterministic parameter init (shapes per the PyTorch module)
# ----------------------------------------------------------------------------
def init_params(key, channel_in, channel_out):
    k1, k2, k3 = jax.random.split(key, 3)

    def conv_init(k, cin, cout):
        kw, kb = jax.random.split(k)
        bound = 1.0 / ((cin * 9) ** 0.5)
        w = jax.random.uniform(kw, (3, 3, cin, cout), jnp.float32, -bound, bound)
        b = jax.random.uniform(kb, (cout,), jnp.float32, -bound, bound)
        return w, b

    w1, b1 = conv_init(k1, channel_in, channel_out)
    w2, b2 = conv_init(k2, channel_out, channel_out)
    w3, b3 = conv_init(k3, channel_in, channel_out)
    return dict(
        w1=w1, b1=b1, w2=w2, b2=b2, w3=w3, b3=b3,   # b1/b3 kept for parity; unused (BN cancels them)
        g1=jnp.ones((channel_out,), jnp.float32),
        be1=jnp.zeros((channel_out,), jnp.float32),
        g3=jnp.ones((channel_out,), jnp.float32),
        be3=jnp.zeros((channel_out,), jnp.float32),
    )


if __name__ == "__main__":
    channel_in, channel_out = 3, 16
    key = jax.random.PRNGKey(0)
    kx, kp = jax.random.split(key)
    x = jax.random.normal(kx, (2, channel_in, 16, 16), jnp.float32)   # NCHW like PyTorch
    params = init_params(kp, channel_in, channel_out)

    out = in_block_forward(x, params, seed=0)
    out = jax.block_until_ready(out)
    assert out.shape == (2, channel_out, 16, 16), out.shape
    assert bool(jnp.all(jnp.isfinite(out)))
    print("KERNEL_OK")
</pallas_src>

<mosaic_0001>
module attributes {stable_mosaic.version = 11 : i64} {
  func.func @_conv13_kernel(%arg0: i32, %arg1: memref<1x16x16x3xbf16, #tpu.memory_space<vmem>>, %arg2: memref<27x32xbf16, #tpu.memory_space<vmem>>, %arg3: memref<1x256x32xbf16, #tpu.memory_space<vmem>>, %arg4: memref<1x8x32xf32, #tpu.memory_space<vmem>>) attributes {dimension_semantics = [#tpu.dimension_semantics<parallel>], iteration_bounds = array<i64: 2>, scalar_prefetch = 0 : i64, scratch_operands = 0 : i64, tpu.core_type = #tpu.core_type<tc>, window_params = [{transform_indices = @transform_0, window_bounds = array<i64: 1, 16, 16, 3>}, {pipeline_mode = #tpu.pipeline_mode<synchronous>, transform_indices = @transform_1, window_bounds = array<i64: 27, 32>}, {transform_indices = @transform_2, window_bounds = array<i64: 1, 256, 32>}, {transform_indices = @transform_3, window_bounds = array<i64: 1, 8, 32>}]} {
    %c0 = arith.constant 0 : index
    %c0_0 = arith.constant 0 : index
    %c0_1 = arith.constant 0 : index
    %c0_2 = arith.constant 0 : index
    %0 = vector.load %arg1[%c0, %c0_0, %c0_1, %c0_2] : memref<1x16x16x3xbf16, #tpu.memory_space<vmem>>, vector<1x16x16x3xbf16>
    %1 = vector.shape_cast %0 : vector<1x16x16x3xbf16> to vector<16x16x3xbf16>
    %cst = arith.constant 0.000000e+00 : bf16
    %2 = vector.broadcast %cst : bf16 to vector<16x1x3xbf16>
    %3 = tpu.concatenate %2, %1, %2 in 1 : vector<16x1x3xbf16>, vector<16x16x3xbf16>, vector<16x1x3xbf16> -> vector<16x18x3xbf16>
    %cst_3 = arith.constant 0.000000e+00 : bf16
    %4 = vector.broadcast %cst_3 : bf16 to vector<1x18x3xbf16>
    %5 = tpu.concatenate %4, %3, %4 in 0 : vector<1x18x3xbf16>, vector<16x18x3xbf16>, vector<1x18x3xbf16> -> vector<18x18x3xbf16>
    %6 = vector.extract_strided_slice %5 {offsets = [0, 0, 0], sizes = [16, 16, 3], strides = [1, 1, 1]} : vector<18x18x3xbf16> to vector<16x16x3xbf16>
    %7 = vector.shape_cast %6 : vector<16x16x3xbf16> to vector<256x3xbf16>
    %8 = vector.extract_strided_slice %5 {offsets = [0, 1, 0], sizes = [16, 16, 3], strides = [1, 1, 1]} : vector<18x18x3xbf16> to vector<16x16x3xbf16>
    %9 = vector.shape_cast %8 : vector<16x16x3xbf16> to vector<256x3xbf16>
    %10 = vector.extract_strided_slice %5 {offsets = [0, 2, 0], sizes = [16, 16, 3], strides = [1, 1, 1]} : vector<18x18x3xbf16> to vector<16x16x3xbf16>
    %11 = vector.shape_cast %10 : vector<16x16x3xbf16> to vector<256x3xbf16>
    %12 = vector.extract_strided_slice %5 {offsets = [1, 0, 0], sizes = [16, 16, 3], strides = [1, 1, 1]} : vector<18x18x3xbf16> to vector<16x16x3xbf16>
    %13 = vector.shape_cast %12 : vector<16x16x3xbf16> to vector<256x3xbf16>
    %14 = vector.extract_strided_slice %5 {offsets = [1, 1, 0], sizes = [16, 16, 3], strides = [1, 1, 1]} : vector<18x18x3xbf16> to vector<16x16x3xbf16>
    %15 = vector.shape_cast %14 : vector<16x16x3xbf16> to vector<256x3xbf16>
    %16 = vector.extract_strided_slice %5 {offsets = [1, 2, 0], sizes = [16, 16, 3], strides = [1, 1, 1]} : vector<18x18x3xbf16> to vector<16x16x3xbf16>
    %17 = vector.shape_cast %16 : vector<16x16x3xbf16> to vector<256x3xbf16>
    %18 = vector.extract_strided_slice %5 {offsets = [2, 0, 0], sizes = [16, 16, 3], strides = [1, 1, 1]} : vector<18x18x3xbf16> to vector<16x16x3xbf16>
    %19 = vector.shape_cast %18 : vector<16x16x3xbf16> to vector<256x3xbf16>
    %20 = vector.extract_strided_slice %5 {offsets = [2, 1, 0], sizes = [16, 16, 3], strides = [1, 1, 1]} : vector<18x18x3xbf16> to vector<16x16x3xbf16>
    %21 = vector.shape_cast %20 : vector<16x16x3xbf16> to vector<256x3xbf16>
    %22 = vector.extract_strided_slice %5 {offsets = [2, 2, 0], sizes = [16, 16, 3], strides = [1, 1, 1]} : vector<18x18x3xbf16> to vector<16x16x3xbf16>
    %23 = vector.shape_cast %22 : vector<16x16x3xbf16> to vector<256x3xbf16>
    %24 = tpu.concatenate %7, %9, %11, %13, %15, %17, %19, %21, %23 in 1 : vector<256x3xbf16>, vector<256x3xbf16>, vector<256x3xbf16>, vector<256x3xbf16>, vector<256x3xbf16>, vector<256x3xbf16>, vector<256x3xbf16>, vector<256x3xbf16>, vector<256x3xbf16> -> vector<256x27xbf16>
    %c0_4 = arith.constant 0 : index
    %c0_5 = arith.constant 0 : index
    %25 = vector.load %arg2[%c0_4, %c0_5] : memref<27x32xbf16, #tpu.memory_space<vmem>>, vector<27x32xbf16>
    %cst_6 = arith.constant dense<0.000000e+00> : vector<256x32xf32>
    %26 = tpu.matmul %24, %25, %cst_6 {dimension_numbers = #tpu.dot_dimension_numbers<[1], [0], [0], [1], [0, 0, 1, 1], [], []>} : vector<256x27xbf16>, vector<27x32xbf16>, vector<256x32xf32> -> vector<256x32xf32>
    %27 = arith.truncf %26 : vector<256x32xf32> to vector<256x32xbf16>
    %c0_7 = arith.constant 0 : index
    %c0_8 = arith.constant 0 : index
    %c0_9 = arith.constant 0 : index
    %28 = vector.load %arg3[%c0_7, %c0_8, %c0_9] : memref<1x256x32xbf16, #tpu.memory_space<vmem>>, vector<1x256x32xbf16>
    %29 = vector.shape_cast %28 : vector<1x256x32xbf16> to vector<256x32xbf16>
    %30 = vector.shape_cast %27 : vector<256x32xbf16> to vector<1x256x32xbf16>
    tpu.vector_store %arg3[%c0_7, %c0_8, %c0_9], %30 {strides = array<i32>} : memref<1x256x32xbf16, #tpu.memory_space<vmem>>, vector<1x256x32xbf16>,
    %cst_10 = arith.constant dense<0.000000e+00> : vector<32xf32>
    %31 = vector.multi_reduction <add>, %26, %cst_10 [0] : vector<256x32xf32> to vector<32xf32>
    %32 = vector.shape_cast %31 : vector<32xf32> to vector<1x32xf32>
    %33 = arith.mulf %26, %26 : vector<256x32xf32>
    %cst_11 = arith.constant dense<0.000000e+00> : vector<32xf32>
    %34 = vector.multi_reduction <add>, %33, %cst_11 [0] : vector<256x32xf32> to vector<32xf32>
    %35 = vector.shape_cast %34 : vector<32xf32> to vector<1x32xf32>
    %cst_12 = arith.constant 0.000000e+00 : f32
    %36 = vector.broadcast %cst_12 : f32 to vector<6x32xf32>
    %37 = tpu.concatenate %32, %35, %36 in 0 : vector<1x32xf32>, vector<1x32xf32>, vector<6x32xf32> -> vector<8x32xf32>
    %c0_13 = arith.constant 0 : index
    %c0_14 = arith.constant 0 : index
    %c0_15 = arith.constant 0 : index
    %38 = vector.load %arg4[%c0_13, %c0_14, %c0_15] : memref<1x8x32xf32, #tpu.memory_space<vmem>>, vector<1x8x32xf32>
    %39 = vector.shape_cast %38 : vector<1x8x32xf32> to vector<8x32xf32>
    %40 = vector.shape_cast %37 : vector<8x32xf32> to vector<1x8x32xf32>
    tpu.vector_store %arg4[%c0_13, %c0_14, %c0_15], %40 {strides = array<i32>} : memref<1x8x32xf32, #tpu.memory_space<vmem>>, vector<1x8x32xf32>,
    return
  }
  func.func @transform_0(%arg0: i32) -> (i32, i32, i32, i32) {
    %c0_i32 = arith.constant 0 : i32
    %c0_i32_0 = arith.constant 0 : i32
    %c0_i32_1 = arith.constant 0 : i32
    %c0_i32_2 = arith.constant 0 : i32
    return %arg0, %c0_i32, %c0_i32_0, %c0_i32_1 : i32, i32, i32, i32
  }
  func.func @transform_1(%arg0: i32) -> (i32, i32) {
    %c0_i32 = arith.constant 0 : i32
    %c0_i32_0 = arith.constant 0 : i32
    %c0_i32_1 = arith.constant 0 : i32
    return %c0_i32, %c0_i32_0 : i32, i32
  }
  func.func @transform_2(%arg0: i32) -> (i32, i32, i32) {
    %c0_i32 = arith.constant 0 : i32
    %c0_i32_0 = arith.constant 0 : i32
    %c0_i32_1 = arith.constant 0 : i32
    return %arg0, %c0_i32, %c0_i32_0 : i32, i32, i32
  }
  func.func @transform_3(%arg0: i32) -> (i32, i32, i32) {
    %c0_i32 = arith.constant 0 : i32
    %c0_i32_0 = arith.constant 0 : i32
    %c0_i32_1 = arith.constant 0 : i32
    return %arg0, %c0_i32, %c0_i32_0 : i32, i32, i32
  }
}

</mosaic_0001>

<llo_original>
// kernel: tpu_custom_call.1
$region0: #{tpu_custom_call.1}
  #allocation0 [shape = 'u32[]', space=smem, size = 0x4, offset = 0x4, fixed_abs, tag = 'smem constant byte address 0x4 - core index']
  #allocation1 [shape = 'u32[144,128]{1,0:T(1,128)}', space=vmem, size = 0x12000, scoped, tag = 'internal scratch']
  %s0 = inlined_call_operand.vmem [shape: bf16[2,16,16,3], index: 0, kind: input, shape index: {}]
  %s1 = inlined_call_operand.vmem [shape: bf16[27,32], index: 1, kind: input, shape index: {}]
  %s2 = inlined_call_operand.vmem [shape: bf16[2,256,32], index: 2, kind: output, shape index: {0}]
  %s3 = inlined_call_operand.hbm [shape: f32[2,8,32], index: 3, kind: output, shape index: {1}]
  %4 = xla_tuple %s2, %s3
  %s5 = sld [smem:[#allocation0]]
  $region49: #{tpu_custom_call.1} parent=0
    _
  %s7 = ssub.s32 1, %s5
  %s8 = scalar_select 0, %s7, %s5
  $region1: #{tpu_custom_call.1} parent=0
    #allocation2 [shape = 'u8[8192]{0}', space=vmem, size = 0x2000, scoped, tag = 'output window, operand 1']
    #allocation3 [shape = 's32[2]{0}', space=sflag, size = 0x8, scoped, tag = 'scoped memory for tpu_custom_call.1']
    %9 = vsyncpa [#allocation3], 0
    %s10 = scalar_lea.sflag [#allocation3], 1
    %11 = vsyncpa %s10, 0
    loop: start=0, step=1, limit=4
    $region2: #{tpu_custom_call.1} parent=1 // loop_pre_header
      _
    $region3: #{tpu_custom_call.1} parent=1 // loop_header
      %s13 = sphi 0, %s17
      %p14 = scmp.ge.s32.totalorder %s13, 4
      %s23 = sphi 0, %s25
      %s26 = sphi 0, %s23
      %s27 = sphi 0, %s26
      %s43 = sphi 0, %s27
      %s47 = sphi 0, %s47
      %s49 = sphi 0, %s47
      %s50 = sphi 0, %s49
      %s64 = sphi 0, %s50
      %s70 = sphi 0, %s72
      %s73 = sphi 0, %s70
      %s74 = sphi 0, %s73
      %s90 = sphi 0, %s74
      %s96 = sphi 0, %s98
      %s99 = sphi 0, %s96
      %s100 = sphi 0, %s99
      %s116 = sphi 0, %s100
    $region4: #{tpu_custom_call.1} parent=1 // loop_header_branch
      %16 = sbr.rel (%p14) target = $region8
    $region5: #{tpu_custom_call.1} parent=1 // loop_body
      %s18 = ssub.s32 %s13, 1
      %s19 = ssub.s32 %s13, 2
      %s20 = sadd.s32 %s13, 1
      %s21 = ssub.s32 %s13, %s20
      %p22 = scmp.eq.s32.totalorder %s21, 0
      %s24 = sadd.s32 %s23, 1
      %s25 = scalar_select %p22, %s23, %s24
      %p28 = pneg %p22
      %p29 = scmp.eq.s32.totalorder %s13, 1
      %p30 = por %p28, %p29
      %p31 = scmp.ne.s32.totalorder %s23, %s26
      %p32 = scmp.eq.s32.totalorder %s13, 0
      %p33 = por %p31, %p32
      %p34 = scmp.ne.s32.totalorder %s23, %s26
      %p35 = scmp.eq.s32.totalorder %s18, 1
      %p36 = por %p34, %p35
      %p37 = scmp.ne.s32.totalorder %s26, %s27
      %p38 = scmp.eq.s32.totalorder %s18, 0
      %p39 = por %p37, %p38
      %p40 = scmp.ne.s32.totalorder %s26, %s27
      %p41 = scmp.eq.s32.totalorder %s19, 1
      %p42 = por %p40, %p41
      %p44 = scmp.ne.s32.totalorder %s27, %s43
      %p45 = scmp.eq.s32.totalorder %s19, 0
      %p46 = por %p44, %p45
      %s48 = sadd.s32 %s47, 1
      %p51 = scmp.eq.s32.totalorder %s13, 1
      %p52 = scmp.ne.s32.totalorder %s47, %s49
      %p53 = scmp.eq.s32.totalorder %s13, 0
      %p54 = por %p52, %p53
      %p55 = scmp.ne.s32.totalorder %s47, %s49
      %p56 = scmp.eq.s32.totalorder %s18, 1
      %p57 = por %p55, %p56
      %p58 = scmp.ne.s32.totalorder %s49, %s50
      %p59 = scmp.eq.s32.totalorder %s18, 0
      %p60 = por %p58, %p59
      %p61 = scmp.ne.s32.totalorder %s49, %s50
      %p62 = scmp.eq.s32.totalorder %s19, 1
      %p63 = por %p61, %p62
      %p65 = scmp.ne.s32.totalorder %s50, %s64
      %p66 = scmp.eq.s32.totalorder %s19, 0
      %p67 = por %p65, %p66
      %s68 = ssub.s32 %s13, %s20
      %p69 = scmp.eq.s32.totalorder %s68, 0
      %s71 = sadd.s32 %s70, 1
      %s72 = scalar_select %p69, %s70, %s71
      %p75 = pneg %p69
      %p76 = scmp.eq.s32.totalorder %s13, 1
      %p77 = por %p75, %p76
      %p78 = scmp.ne.s32.totalorder %s70, %s73
      %p79 = scmp.eq.s32.totalorder %s13, 0
      %p80 = por %p78, %p79
      %p81 = scmp.ne.s32.totalorder %s70, %s73
      %p82 = scmp.eq.s32.totalorder %s18, 1
      %p83 = por %p81, %p82
      %p84 = scmp.ne.s32.totalorder %s73, %s74
      %p85 = scmp.eq.s32.totalorder %s18, 0
      %p86 = por %p84, %p85
      %p87 = scmp.ne.s32.totalorder %s73, %s74
      %p88 = scmp.eq.s32.totalorder %s19, 1
      %p89 = por %p87, %p88
      %p91 = scmp.ne.s32.totalorder %s74, %s90
      %p92 = scmp.eq.s32.totalorder %s19, 0
      %p93 = por %p91, %p92
      %s94 = ssub.s32 %s13, %s20
      %p95 = scmp.eq.s32.totalorder %s94, 0
      %s97 = sadd.s32 %s96, 1
      %s98 = scalar_select %p95, %s96, %s97
      %p101 = pneg %p95
      %p102 = scmp.eq.s32.totalorder %s13, 1
      %p103 = por %p101, %p102
      %p104 = scmp.ne.s32.totalorder %s96, %s99
      %p105 = scmp.eq.s32.totalorder %s13, 0
      %p106 = por %p104, %p105
      %p107 = scmp.ne.s32.totalorder %s96, %s99
      %p108 = scmp.eq.s32.totalorder %s18, 1
      %p109 = por %p107, %p108
      %p110 = scmp.ne.s32.totalorder %s99, %s100
      %p111 = scmp.eq.s32.totalorder %s18, 0
      %p112 = por %p110, %p111
      %p113 = scmp.ne.s32.totalorder %s99, %s100
      %p114 = scmp.eq.s32.totalorder %s19, 1
      %p115 = por %p113, %p114
      %p117 = scmp.ne.s32.totalorder %s100, %s116
      %p118 = scmp.eq.s32.totalorder %s19, 0
      %p119 = por %p117, %p118
      %p120 = scmp.le.s32.totalorder 1, %s13
      %p121 = scmp.lt.s32.totalorder %s13, 3
      %p122 = pnand %p120, %p121
      %p123 = pneg %p122
      // Predicated region
      $region9: #{tpu_custom_call.1} parent=5 // pred_check
        _
      $region10: #{tpu_custom_call.1} parent=5 // pred_check_branch
        %125 = sbr.rel (%p122) target = $region12
      $region11: #{tpu_custom_call.1} parent=5 // pred_region
        %s126 = ssub.s32 %s13, 1
        // Predicated region
        $region13: #{tpu_custom_call.1} parent=11 // pred_check
          %p127 = pneg %p60
        $region14: #{tpu_custom_call.1} parent=11 // pred_check_branch
          %129 = sbr.rel (%p127) target = $region16
        $region15: #{tpu_custom_call.1} parent=11 // pred_region
          _
        $region16: #{tpu_custom_call.1} parent=11 // pred_fallthru
          _
      $region12: #{tpu_custom_call.1} parent=5 // pred_fallthru
        _
      %p130 = scmp.lt.s32.totalorder %s13, 2
      // Predicated region
      $region17: #{tpu_custom_call.1} parent=5 // pred_check
        %p131 = pneg %p130
      $region18: #{tpu_custom_call.1} parent=5 // pred_check_branch
        %133 = sbr.rel (%p131) target = $region20
      $region19: #{tpu_custom_call.1} parent=5 // pred_region
        // Predicated region
        $region21: #{tpu_custom_call.1} parent=19 // pred_check
          %p134 = pneg %p33
        $region22: #{tpu_custom_call.1} parent=19 // pred_check_branch
          %136 = sbr.rel (%p134) target = $region24
        $region23: #{tpu_custom_call.1} parent=19 // pred_region
          %p137 = scmp.lt.s32.totalorder %s13, 1
          %s138 = scalar_select %p137, %s13, 1
          %s139 = smul.addr %s138, 32
          %s140 = smul.addr %s139, 4
          %s141 = scalar_lea.vmem %s0, %s140
        $region24: #{tpu_custom_call.1} parent=19 // pred_fallthru
          _
      $region20: #{tpu_custom_call.1} parent=5 // pred_fallthru
        _
      %p142 = scmp.le.s32.totalorder 1, %s13
      %p143 = scmp.lt.s32.totalorder %s13, 3
      %p144 = pnand %p142, %p143
      %p145 = pneg %p144
      // Predicated region
      $region25: #{tpu_custom_call.1} parent=5 // pred_check
        _
      $region26: #{tpu_custom_call.1} parent=5 // pred_check_branch
        %147 = sbr.rel (%p144) target = $region28
      $region27: #{tpu_custom_call.1} parent=5 // pred_region
        %s148 = ssub.s32 %s13, 1
        %p149 = scmp.lt.s32.totalorder %s18, 1
        %s150 = scalar_select %p149, %s18, 1
        %s151 = smul.addr %s150, 32
        %s152 = smul.addr %s151, 4
        %s153 = scalar_lea.vmem %s0, %s152
        %p154 = pneg %p39
        %p155 = pneg %p36
        %p156 = pneg %p60
        %p157 = pneg %p57
        %p158 = pneg %p86
        %p159 = pneg %p83
        %p160 = scmp.lt.s32.totalorder %s18, 1
        %s161 = scalar_select %p160, %s18, 1
        %s162 = smul.addr %s161, 32
        %s163 = smul.addr %s162, 4
        %s164 = scalar_lea.vmem %s2, %s163
        %p165 = pneg %p112
        %p166 = pneg %p109
        %s167 = sand.u32 %s99, 1
        %s168 = scalar_lea.sflag [#allocation3], %s167
        %s169 = sand.u32 %s99, 1
        %s170 = smul.addr %s169, 8
        %s171 = scalar_lea.vmem [#allocation2], %s170
        %p172 = scmp.lt.s32.totalorder %s18, 1
        %s173 = scalar_select %p172, %s18, 1
        %s174 = smul.addr %s173, 32
        %s175 = smul.addr %s174, 4
        %s176 = scalar_lea.vmem %s0, %s175
        %p177 = scmp.lt.s32.totalorder %s18, 1
        %s178 = scalar_select %p177, %s18, 1
        %s179 = smul.addr %s178, 32
        %s180 = smul.addr %s179, 4
        %s181 = scalar_lea.vmem %s2, %s180
        %v183 = vld [vmem:[%s176] sm:$0xf]
        %v184 = vld [vmem:[%s176 + $0x4] sm:$0xf]
        %v185 = vld [vmem:[%s176 + $0x8] sm:$0xf]
        %v186 = vld [vmem:[%s176 + $0xc] sm:$0xf]
        %v187 = vld [vmem:[%s176 + $0x10] sm:$0xf]
        %v188 = vld [vmem:[%s176 + $0x14] sm:$0xf]
        %v189 = vld [vmem:[%s176 + $0x18] sm:$0xf]
        %v190 = vld [vmem:[%s176 + $0x1c] sm:$0xf]
        %v191 = vld [vmem:[%s176 + $0x20] sm:$0xf]
        %v192 = vld [vmem:[%s176 + $0x24] sm:$0xf]
        %v193 = vld [vmem:[%s176 + $0x28] sm:$0xf]
        %v194 = vld [vmem:[%s176 + $0x2c] sm:$0xf]
        %v195 = vld [vmem:[%s176 + $0x30] sm:$0xf]
        %v196 = vld [vmem:[%s176 + $0x34] sm:$0xf]
        %v197 = vld [vmem:[%s176 + $0x38] sm:$0xf]
        %v198 = vld [vmem:[%s176 + $0x3c] sm:$0xf]
        %v199 = vld [vmem:[%s176 + $0x40] sm:$0xf]
        %v200 = vld [vmem:[%s176 + $0x44] sm:$0xf]
        %v201 = vld [vmem:[%s176 + $0x48] sm:$0xf]
        %v202 = vld [vmem:[%s176 + $0x4c] sm:$0xf]
        %v203 = vld [vmem:[%s176 + $0x50] sm:$0xf]
        %v204 = vld [vmem:[%s176 + $0x54] sm:$0xf]
        %v205 = vld [vmem:[%s176 + $0x58] sm:$0xf]
        %v206 = vld [vmem:[%s176 + $0x5c] sm:$0xf]
        %v207 = vld [vmem:[%s176 + $0x60] sm:$0xf]
        %v208 = vld [vmem:[%s176 + $0x64] sm:$0xf]
        %v209 = vld [vmem:[%s176 + $0x68] sm:$0xf]
        %v210 = vld [vmem:[%s176 + $0x6c] sm:$0xf]
        %v211 = vld [vmem:[%s176 + $0x70] sm:$0xf]
        %v212 = vld [vmem:[%s176 + $0x74] sm:$0xf]
        %v213 = vld [vmem:[%s176 + $0x78] sm:$0xf]
        %v214 = vld [vmem:[%s176 + $0x7c] sm:$0xf]
        %v247 = vunpack.c.l.b16 %v183
        %v248 = vunpack.c.l.b16 %v184
        %v249 = vunpack.c.l.b16 %v185
        %v250 = vunpack.c.l.b16 %v186
        %v251 = vunpack.c.l.b16 %v187
        %v252 = vunpack.c.l.b16 %v188
        %v253 = vunpack.c.l.b16 %v189
        %v254 = vunpack.c.l.b16 %v190
        %v255 = vunpack.c.l.b16 %v191
        %v256 = vunpack.c.l.b16 %v192
        %v257 = vunpack.c.l.b16 %v193
        %v258 = vunpack.c.l.b16 %v194
        %v259 = vunpack.c.l.b16 %v195
        %v260 = vunpack.c.l.b16 %v196
        %v261 = vunpack.c.l.b16 %v197
        %v262 = vunpack.c.l.b16 %v198
        %v263 = vunpack.c.l.b16 %v199
        %v264 = vunpack.c.l.b16 %v200
        %v265 = vunpack.c.l.b16 %v201
        %v266 = vunpack.c.l.b16 %v202
        %v267 = vunpack.c.l.b16 %v203
        %v268 = vunpack.c.l.b16 %v204
        %v269 = vunpack.c.l.b16 %v205
        %v270 = vunpack.c.l.b16 %v206
        %v271 = vunpack.c.l.b16 %v207
        %v272 = vunpack.c.l.b16 %v208
        %v273 = vunpack.c.l.b16 %v209
        %v274 = vunpack.c.l.b16 %v210
        %v275 = vunpack.c.l.b16 %v211
        %v276 = vunpack.c.l.b16 %v212
        %v277 = vunpack.c.l.b16 %v213
        %v278 = vunpack.c.l.b16 %v214
        %v279 = vpack.c.b16 %v248, %v247
        %v280 = vpack.c.b16 %v250, %v249
        %v281 = vpack.c.b16 %v252, %v251
        %v282 = vpack.c.b16 %v254, %v253
        %v283 = vpack.c.b16 %v256, %v255
        %v284 = vpack.c.b16 %v258, %v257
        %v285 = vpack.c.b16 %v260, %v259
        %v286 = vpack.c.b16 %v262, %v261
        %v287 = vpack.c.b16 %v264, %v263
        %v288 = vpack.c.b16 %v266, %v265
        %v289 = vpack.c.b16 %v268, %v267
        %v290 = vpack.c.b16 %v270, %v269
        %v291 = vpack.c.b16 %v272, %v271
        %v292 = vpack.c.b16 %v274, %v273
        %v293 = vpack.c.b16 %v276, %v275
        %v294 = vpack.c.b16 %v278, %v277
        %v296 = vshrl.u32 %v279, 16
        %v298 = vrot.slane %v296, 7
        %v299 = vshll.u32 %v279, 16
        %v301 = vor.u32 %v298, %v299
        %v303 = vshrl.u32 %v280, 16
        %v305 = vrot.slane %v303, 7
        %v306 = vshll.u32 %v280, 16
        %v308 = vor.u32 %v305, %v306
        %v310 = vshrl.u32 %v281, 16
        %v312 = vrot.slane %v310, 7
        %v313 = vshll.u32 %v281, 16
        %v315 = vor.u32 %v312, %v313
        %v317 = vshrl.u32 %v282, 16
        %v319 = vrot.slane %v317, 7
        %v320 = vshll.u32 %v282, 16
        %v322 = vor.u32 %v319, %v320
        %v324 = vshrl.u32 %v283, 16
        %v326 = vrot.slane %v324, 7
        %v327 = vshll.u32 %v283, 16
        %v329 = vor.u32 %v326, %v327
        %v331 = vshrl.u32 %v284, 16
        %v333 = vrot.slane %v331, 7
        %v334 = vshll.u32 %v284, 16
        %v336 = vor.u32 %v333, %v334
        %v338 = vshrl.u32 %v285, 16
        %v340 = vrot.slane %v338, 7
        %v341 = vshll.u32 %v285, 16
        %v343 = vor.u32 %v340, %v341
        %v345 = vshrl.u32 %v286, 16
        %v347 = vrot.slane %v345, 7
        %v348 = vshll.u32 %v286, 16
        %v350 = vor.u32 %v347, %v348
        %v352 = vshrl.u32 %v287, 16
        %v354 = vrot.slane %v352, 7
        %v355 = vshll.u32 %v287, 16
        %v357 = vor.u32 %v354, %v355
        %v359 = vshrl.u32 %v288, 16
        %v361 = vrot.slane %v359, 7
        %v362 = vshll.u32 %v288, 16
        %v364 = vor.u32 %v361, %v362
        %v366 = vshrl.u32 %v289, 16
        %v368 = vrot.slane %v366, 7
        %v369 = vshll.u32 %v289, 16
        %v371 = vor.u32 %v368, %v369
        %v373 = vshrl.u32 %v290, 16
        %v375 = vrot.slane %v373, 7
        %v376 = vshll.u32 %v290, 16
        %v378 = vor.u32 %v375, %v376
        %v380 = vshrl.u32 %v291, 16
        %v382 = vrot.slane %v380, 7
        %v383 = vshll.u32 %v291, 16
        %v385 = vor.u32 %v382, %v383
        %v387 = vshrl.u32 %v292, 16
        %v389 = vrot.slane %v387, 7
        %v390 = vshll.u32 %v292, 16
        %v392 = vor.u32 %v389, %v390
        %v394 = vshrl.u32 %v293, 16
        %v396 = vrot.slane %v394, 7
        %v397 = vshll.u32 %v293, 16
        %v399 = vor.u32 %v396, %v397
        %v401 = vshrl.u32 %v294, 16
        %v403 = vrot.slane %v401, 7
        %v404 = vshll.u32 %v294, 16
        %v406 = vor.u32 %v403, %v404
        %vm439 = vcmask 1040384
        %vm440 = vsmask.f32 256
        %vm441 = vmand %vm439, %vm440
        %v442 = vsel %vm441, 0, %v301
        %v443 = vsel %vm441, 0, %v308
        %v444 = vsel %vm441, 0, %v315
        %v445 = vsel %vm441, 0, %v322
        %v446 = vsel %vm441, 0, %v329
        %v447 = vsel %vm441, 0, %v336
        %v448 = vsel %vm441, 0, %v343
        %v449 = vsel %vm441, 0, %v350
        %v450 = vsel %vm441, 0, %v357
        %v451 = vsel %vm441, 0, %v364
        %v452 = vsel %vm441, 0, %v371
        %v453 = vsel %vm441, 0, %v378
        %v454 = vsel %vm441, 0, %v385
        %v455 = vsel %vm441, 0, %v392
        %v456 = vsel %vm441, 0, %v399
        %v457 = vsel %vm441, 0, %v406
        %v458 = vsel %vm441, %v298, 0
        %v459 = vsel %vm441, %v305, 0
        %v460 = vsel %vm441, %v312, 0
        %v461 = vsel %vm441, %v319, 0
        %v462 = vsel %vm441, %v326, 0
        %v463 = vsel %vm441, %v333, 0
        %v464 = vsel %vm441, %v340, 0
        %v465 = vsel %vm441, %v347, 0
        %v466 = vsel %vm441, %v354, 0
        %v467 = vsel %vm441, %v361, 0
        %v468 = vsel %vm441, %v368, 0
        %v469 = vsel %vm441, %v375, 0
        %v470 = vsel %vm441, %v382, 0
        %v471 = vsel %vm441, %v389, 0
        %v472 = vsel %vm441, %v396, 0
        %v473 = vsel %vm441, %v403, 0
        %vm474 = vsmask.f32 7424
        %v476 = vshrl.u32 0, 16
        %v478 = vshll.u32 0, 16
        %v480 = vrot.slane %v478, 1
        %v481 = vor.u32 %v476, %v480
        %v482 = vsel %vm474, %v481, %v480
        %v484 = vshrl.u32 %v442, 16
        %v486 = vshll.u32 %v442, 16
        %v488 = vrot.slane %v486, 1
        %v489 = vor.u32 %v484, %v488
        %v491 = vshll.u32 %v458, 16
        %v493 = vrot.slane %v491, 1
        %v494 = vsel %vm474, %v489, %v493
        %v496 = vshrl.u32 %v443, 16
        %v498 = vshll.u32 %v443, 16
        %v500 = vrot.slane %v498, 1
        %v501 = vor.u32 %v496, %v500
        %v503 = vshll.u32 %v459, 16
        %v505 = vrot.slane %v503, 1
        %v506 = vsel %vm474, %v501, %v505
        %v508 = vshrl.u32 %v444, 16
        %v510 = vshll.u32 %v444, 16
        %v512 = vrot.slane %v510, 1
        %v513 = vor.u32 %v508, %v512
        %v515 = vshll.u32 %v460, 16
        %v517 = vrot.slane %v515, 1
        %v518 = vsel %vm474, %v513, %v517
        %v520 = vshrl.u32 %v445, 16
        %v522 = vshll.u32 %v445, 16
        %v524 = vrot.slane %v522, 1
        %v525 = vor.u32 %v520, %v524
        %v527 = vshll.u32 %v461, 16
        %v529 = vrot.slane %v527, 1
        %v530 = vsel %vm474, %v525, %v529
        %v532 = vshrl.u32 %v446, 16
        %v534 = vshll.u32 %v446, 16
        %v536 = vrot.slane %v534, 1
        %v537 = vor.u32 %v532, %v536
        %v539 = vshll.u32 %v462, 16
        %v541 = vrot.slane %v539, 1
        %v542 = vsel %vm474, %v537, %v541
        %v544 = vshrl.u32 %v447, 16
        %v546 = vshll.u32 %v447, 16
        %v548 = vrot.slane %v546, 1
        %v549 = vor.u32 %v544, %v548
        %v551 = vshll.u32 %v463, 16
        %v553 = vrot.slane %v551, 1
        %v554 = vsel %vm474, %v549, %v553
        %v556 = vshrl.u32 %v448, 16
        %v558 = vshll.u32 %v448, 16
        %v560 = vrot.slane %v558, 1
        %v561 = vor.u32 %v556, %v560
        %v563 = vshll.u32 %v464, 16
        %v565 = vrot.slane %v563, 1
        %v566 = vsel %vm474, %v561, %v565
        %v568 = vshrl.u32 %v449, 16
        %v570 = vshll.u32 %v449, 16
        %v572 = vrot.slane %v570, 1
        %v573 = vor.u32 %v568, %v572
        %v575 = vshll.u32 %v465, 16
        %v577 = vrot.slane %v575, 1
        %v578 = vsel %vm474, %v573, %v577
        %v580 = vshrl.u32 %v450, 16
        %v582 = vshll.u32 %v450, 16
        %v584 = vrot.slane %v582, 1
        %v585 = vor.u32 %v580, %v584
        %v587 = vshll.u32 %v466, 16
        %v589 = vrot.slane %v587, 1
        %v590 = vsel %vm474, %v585, %v589
        %v592 = vshrl.u32 %v451, 16
        %v594 = vshll.u32 %v451, 16
        %v596 = vrot.slane %v594, 1
        %v597 = vor.u32 %v592, %v596
        %v599 = vshll.u32 %v467, 16
        %v601 = vrot.slane %v599, 1
        %v602 = vsel %vm474, %v597, %v601
        %v604 = vshrl.u32 %v452, 16
        %v606 = vshll.u32 %v452, 16
        %v608 = vrot.slane %v606, 1
        %v609 = vor.u32 %v604, %v608
        %v611 = vshll.u32 %v468, 16
        %v613 = vrot.slane %v611, 1
        %v614 = vsel %vm474, %v609, %v613
        %v616 = vshrl.u32 %v453, 16
        %v618 = vshll.u32 %v453, 16
        %v620 = vrot.slane %v618, 1
        %v621 = vor.u32 %v616, %v620
        %v623 = vshll.u32 %v469, 16
        %v625 = vrot.slane %v623, 1
        %v626 = vsel %vm474, %v621, %v625
        %v628 = vshrl.u32 %v454, 16
        %v630 = vshll.u32 %v454, 16
        %v632 = vrot.slane %v630, 1
        %v633 = vor.u32 %v628, %v632
        %v635 = vshll.u32 %v470, 16
        %v637 = vrot.slane %v635, 1
        %v638 = vsel %vm474, %v633, %v637
        %v640 = vshrl.u32 %v455, 16
        %v642 = vshll.u32 %v455, 16
        %v644 = vrot.slane %v642, 1
        %v645 = vor.u32 %v640, %v644
        %v647 = vshll.u32 %v471, 16
        %v649 = vrot.slane %v647, 1
        %v650 = vsel %vm474, %v645, %v649
        %v652 = vshrl.u32 %v456, 16
        %v654 = vshll.u32 %v456, 16
        %v656 = vrot.slane %v654, 1
        %v657 = vor.u32 %v652, %v656
        %v659 = vshll.u32 %v472, 16
        %v661 = vrot.slane %v659, 1
        %v662 = vsel %vm474, %v657, %v661
        %vm694 = vcmask 1046528
        %v695 = vrot.slane 0, 1
        %v696 = vsel %vm694, %v695, %v695
        %v697 = vrot.slane %v442, 1
        %v698 = vrot.slane %v458, 1
        %v699 = vsel %vm694, %v697, %v698
        %v700 = vrot.slane %v443, 1
        %v701 = vrot.slane %v459, 1
        %v702 = vsel %vm694, %v700, %v701
        %v703 = vrot.slane %v444, 1
        %v704 = vrot.slane %v460, 1
        %v705 = vsel %vm694, %v703, %v704
        %v706 = vrot.slane %v445, 1
        %v707 = vrot.slane %v461, 1
        %v708 = vsel %vm694, %v706, %v707
        %v709 = vrot.slane %v446, 1
        %v710 = vrot.slane %v462, 1
        %v711 = vsel %vm694, %v709, %v710
        %v712 = vrot.slane %v447, 1
        %v713 = vrot.slane %v463, 1
        %v714 = vsel %vm694, %v712, %v713
        %v715 = vrot.slane %v448, 1
        %v716 = vrot.slane %v464, 1
        %v717 = vsel %vm694, %v715, %v716
        %v718 = vrot.slane %v449, 1
        %v719 = vrot.slane %v465, 1
        %v720 = vsel %vm694, %v718, %v719
        %v721 = vrot.slane %v450, 1
        %v722 = vrot.slane %v466, 1
        %v723 = vsel %vm694, %v721, %v722
        %v724 = vrot.slane %v451, 1
        %v725 = vrot.slane %v467, 1
        %v726 = vsel %vm694, %v724, %v725
        %v727 = vrot.slane %v452, 1
        %v728 = vrot.slane %v468, 1
        %v729 = vsel %vm694, %v727, %v728
        %v730 = vrot.slane %v453, 1
        %v731 = vrot.slane %v469, 1
        %v732 = vsel %vm694, %v730, %v731
        %v733 = vrot.slane %v454, 1
        %v734 = vrot.slane %v470, 1
        %v735 = vsel %vm694, %v733, %v734
        %v736 = vrot.slane %v455, 1
        %v737 = vrot.slane %v471, 1
        %v738 = vsel %vm694, %v736, %v737
        %v739 = vrot.slane %v456, 1
        %v740 = vrot.slane %v472, 1
        %v741 = vsel %vm694, %v739, %v740
        %v743 = vshrl.u32 %v457, 16
        %v745 = vshll.u32 %v457, 16
        %v747 = vrot.slane %v745, 1
        %v748 = vor.u32 %v743, %v747
        %v750 = vshll.u32 %v473, 16
        %v752 = vrot.slane %v750, 1
        %v753 = vsel %vm474, %v748, %v752
        %v756 = vrot.slane %v457, 1
        %v757 = vrot.slane %v473, 1
        %v758 = vsel %vm694, %v756, %v757
        %759 = vrot.lane.b32.xlu0 %v482, 3
        %v760 = vpop.permute.xlu0 %759
        %761 = vrot.lane.b32.xlu0 %v494, 3
        %v762 = vpop.permute.xlu0 %761
        %763 = vrot.lane.b32.xlu0 %v506, 3
        %v764 = vpop.permute.xlu0 %763
        %765 = vrot.lane.b32.xlu0 %v518, 3
        %v766 = vpop.permute.xlu0 %765
        %767 = vrot.lane.b32.xlu0 %v530, 3
        %v768 = vpop.permute.xlu0 %767
        %769 = vrot.lane.b32.xlu0 %v542, 3
        %v770 = vpop.permute.xlu0 %769
        %771 = vrot.lane.b32.xlu0 %v554, 3
        %v772 = vpop.permute.xlu0 %771
        %773 = vrot.lane.b32.xlu0 %v566, 3
        %v774 = vpop.permute.xlu0 %773
        %775 = vrot.lane.b32.xlu0 %v578, 3
        %v776 = vpop.permute.xlu0 %775
        %777 = vrot.lane.b32.xlu0 %v590, 3
        %v778 = vpop.permute.xlu0 %777
        %779 = vrot.lane.b32.xlu0 %v602, 3
        %v780 = vpop.permute.xlu0 %779
        %781 = vrot.lane.b32.xlu0 %v614, 3
        %v782 = vpop.permute.xlu0 %781
        %783 = vrot.lane.b32.xlu0 %v626, 3
        %v784 = vpop.permute.xlu0 %783
        %785 = vrot.lane.b32.xlu0 %v638, 3
        %v786 = vpop.permute.xlu0 %785
        %787 = vrot.lane.b32.xlu0 %v650, 3
        %v788 = vpop.permute.xlu0 %787
        %789 = vrot.lane.b32.xlu0 %v662, 3
        %v790 = vpop.permute.xlu0 %789
        %791 = vrot.lane.b32.xlu0 %v696, 6
        %v792 = vpop.permute.xlu0 %791
        %793 = vrot.lane.b32.xlu0 %v699, 6
        %v794 = vpop.permute.xlu0 %793
        %795 = vrot.lane.b32.xlu0 %v702, 6
        %v796 = vpop.permute.xlu0 %795
        %797 = vrot.lane.b32.xlu0 %v705, 6
        %v798 = vpop.permute.xlu0 %797
        %799 = vrot.lane.b32.xlu0 %v708, 6
        %v800 = vpop.permute.xlu0 %799
        %801 = vrot.lane.b32.xlu0 %v711, 6
        %v802 = vpop.permute.xlu0 %801
        %803 = vrot.lane.b32.xlu0 %v714, 6
        %v804 = vpop.permute.xlu0 %803
        %805 = vrot.lane.b32.xlu0 %v717, 6
        %v806 = vpop.permute.xlu0 %805
        %807 = vrot.lane.b32.xlu0 %v720, 6
        %v808 = vpop.permute.xlu0 %807
        %809 = vrot.lane.b32.xlu0 %v723, 6
        %v810 = vpop.permute.xlu0 %809
        %811 = vrot.lane.b32.xlu0 %v726, 6
        %v812 = vpop.permute.xlu0 %811
        %813 = vrot.lane.b32.xlu0 %v729, 6
        %v814 = vpop.permute.xlu0 %813
        %815 = vrot.lane.b32.xlu0 %v732, 6
        %v816 = vpop.permute.xlu0 %815
        %817 = vrot.lane.b32.xlu0 %v735, 6
        %v818 = vpop.permute.xlu0 %817
        %819 = vrot.lane.b32.xlu0 %v738, 6
        %v820 = vpop.permute.xlu0 %819
        %821 = vrot.lane.b32.xlu0 %v741, 6
        %v822 = vpop.permute.xlu0 %821
        %823 = vrot.lane.b32.xlu0 %v442, 9
        %v824 = vpop.permute.xlu0 %823
        %825 = vrot.lane.b32.xlu0 %v443, 9
        %v826 = vpop.permute.xlu0 %825
        %827 = vrot.lane.b32.xlu0 %v444, 9
        %v828 = vpop.permute.xlu0 %827
        %829 = vrot.lane.b32.xlu0 %v445, 9
        %v830 = vpop.permute.xlu0 %829
        %831 = vrot.lane.b32.xlu0 %v446, 9
        %v832 = vpop.permute.xlu0 %831
        %833 = vrot.lane.b32.xlu0 %v447, 9
        %v834 = vpop.permute.xlu0 %833
        %835 = vrot.lane.b32.xlu0 %v448, 9
        %v836 = vpop.permute.xlu0 %835
        %837 = vrot.lane.b32.xlu0 %v449, 9
        %v838 = vpop.permute.xlu0 %837
        %839 = vrot.lane.b32.xlu0 %v450, 9
        %v840 = vpop.permute.xlu0 %839
        %841 = vrot.lane.b32.xlu0 %v451, 9
        %v842 = vpop.permute.xlu0 %841
        %843 = vrot.lane.b32.xlu0 %v452, 9
        %v844 = vpop.permute.xlu0 %843
        %845 = vrot.lane.b32.xlu0 %v453, 9
        %v846 = vpop.permute.xlu0 %845
        %847 = vrot.lane.b32.xlu0 %v454, 9
        %v848 = vpop.permute.xlu0 %847
        %849 = vrot.lane.b32.xlu0 %v455, 9
        %v850 = vpop.permute.xlu0 %849
        %851 = vrot.lane.b32.xlu0 %v456, 9
        %v852 = vpop.permute.xlu0 %851
        %853 = vrot.lane.b32.xlu0 %v457, 9
        %v854 = vpop.permute.xlu0 %853
        %855 = vrot.lane.b32.xlu0 %v494, 12
        %v856 = vpop.permute.xlu0 %855
        %857 = vrot.lane.b32.xlu0 %v506, 12
        %v858 = vpop.permute.xlu0 %857
        %859 = vrot.lane.b32.xlu0 %v518, 12
        %v860 = vpop.permute.xlu0 %859
        %861 = vrot.lane.b32.xlu0 %v530, 12
        %v862 = vpop.permute.xlu0 %861
        %863 = vrot.lane.b32.xlu0 %v542, 12
        %v864 = vpop.permute.xlu0 %863
        %865 = vrot.lane.b32.xlu0 %v554, 12
        %v866 = vpop.permute.xlu0 %865
        %867 = vrot.lane.b32.xlu0 %v566, 12
        %v868 = vpop.permute.xlu0 %867
        %869 = vrot.lane.b32.xlu0 %v578, 12
        %v870 = vpop.permute.xlu0 %869
        %871 = vrot.lane.b32.xlu0 %v590, 12
        %v872 = vpop.permute.xlu0 %871
        %873 = vrot.lane.b32.xlu0 %v602, 12
        %v874 = vpop.permute.xlu0 %873
        %875 = vrot.lane.b32.xlu0 %v614, 12
        %v876 = vpop.permute.xlu0 %875
        %877 = vrot.lane.b32.xlu0 %v626, 12
        %v878 = vpop.permute.xlu0 %877
        %879 = vrot.lane.b32.xlu0 %v638, 12
        %v880 = vpop.permute.xlu0 %879
        %881 = vrot.lane.b32.xlu0 %v650, 12
        %v882 = vpop.permute.xlu0 %881
        %883 = vrot.lane.b32.xlu0 %v662, 12
        %v884 = vpop.permute.xlu0 %883
        %885 = vrot.lane.b32.xlu0 %v753, 12
        %v886 = vpop.permute.xlu0 %885
        %887 = vrot.lane.b32.xlu0 %v699, 15
        %v888 = vpop.permute.xlu0 %887
        %889 = vrot.lane.b32.xlu0 %v702, 15
        %v890 = vpop.permute.xlu0 %889
        %891 = vrot.lane.b32.xlu0 %v705, 15
        %v892 = vpop.permute.xlu0 %891
        %893 = vrot.lane.b32.xlu0 %v708, 15
        %v894 = vpop.permute.xlu0 %893
        %895 = vrot.lane.b32.xlu0 %v711, 15
        %v896 = vpop.permute.xlu0 %895
        %897 = vrot.lane.b32.xlu0 %v714, 15
        %v898 = vpop.permute.xlu0 %897
        %899 = vrot.lane.b32.xlu0 %v717, 15
        %v900 = vpop.permute.xlu0 %899
        %901 = vrot.lane.b32.xlu0 %v720, 15
        %v902 = vpop.permute.xlu0 %901
        %903 = vrot.lane.b32.xlu0 %v723, 15
        %v904 = vpop.permute.xlu0 %903
        %905 = vrot.lane.b32.xlu0 %v726, 15
        %v906 = vpop.permute.xlu0 %905
        %907 = vrot.lane.b32.xlu0 %v729, 15
        %v908 = vpop.permute.xlu0 %907
        %909 = vrot.lane.b32.xlu0 %v732, 15
        %v910 = vpop.permute.xlu0 %909
        %911 = vrot.lane.b32.xlu0 %v735, 15
        %v912 = vpop.permute.xlu0 %911
        %913 = vrot.lane.b32.xlu0 %v738, 15
        %v914 = vpop.permute.xlu0 %913
        %915 = vrot.lane.b32.xlu0 %v741, 15
        %v916 = vpop.permute.xlu0 %915
        %917 = vrot.lane.b32.xlu0 %v758, 15
        %v918 = vpop.permute.xlu0 %917
        %919 = vrot.lane.b32.xlu0 %v443, 18
        %v920 = vpop.permute.xlu0 %919
        %921 = vrot.lane.b32.xlu0 %v444, 18
        %v922 = vpop.permute.xlu0 %921
        %923 = vrot.lane.b32.xlu0 %v445, 18
        %v924 = vpop.permute.xlu0 %923
        %925 = vrot.lane.b32.xlu0 %v446, 18
        %v926 = vpop.permute.xlu0 %925
        %927 = vrot.lane.b32.xlu0 %v447, 18
        %v928 = vpop.permute.xlu0 %927
        %929 = vrot.lane.b32.xlu0 %v448, 18
        %v930 = vpop.permute.xlu0 %929
        %931 = vrot.lane.b32.xlu0 %v449, 18
        %v932 = vpop.permute.xlu0 %931
        %933 = vrot.lane.b32.xlu0 %v450, 18
        %v934 = vpop.permute.xlu0 %933
        %935 = vrot.lane.b32.xlu0 %v451, 18
        %v936 = vpop.permute.xlu0 %935
        %937 = vrot.lane.b32.xlu0 %v452, 18
        %v938 = vpop.permute.xlu0 %937
        %939 = vrot.lane.b32.xlu0 %v453, 18
        %v940 = vpop.permute.xlu0 %939
        %941 = vrot.lane.b32.xlu0 %v454, 18
        %v942 = vpop.permute.xlu0 %941
        %943 = vrot.lane.b32.xlu0 %v455, 18
        %v944 = vpop.permute.xlu0 %943
        %945 = vrot.lane.b32.xlu0 %v456, 18
        %v946 = vpop.permute.xlu0 %945
        %947 = vrot.lane.b32.xlu0 %v457, 18
        %v948 = vpop.permute.xlu0 %947
        %949 = vrot.lane.b32.xlu0 0, 18
        %v950 = vpop.permute.xlu0 %949
        %951 = vrot.lane.b32.xlu0 %v506, 21
        %v952 = vpop.permute.xlu0 %951
        %953 = vrot.lane.b32.xlu0 %v518, 21
        %v954 = vpop.permute.xlu0 %953
        %955 = vrot.lane.b32.xlu0 %v530, 21
        %v956 = vpop.permute.xlu0 %955
        %957 = vrot.lane.b32.xlu0 %v542, 21
        %v958 = vpop.permute.xlu0 %957
        %959 = vrot.lane.b32.xlu0 %v554, 21
        %v960 = vpop.permute.xlu0 %959
        %961 = vrot.lane.b32.xlu0 %v566, 21
        %v962 = vpop.permute.xlu0 %961
        %963 = vrot.lane.b32.xlu0 %v578, 21
        %v964 = vpop.permute.xlu0 %963
        %965 = vrot.lane.b32.xlu0 %v590, 21
        %v966 = vpop.permute.xlu0 %965
        %967 = vrot.lane.b32.xlu0 %v602, 21
        %v968 = vpop.permute.xlu0 %967
        %969 = vrot.lane.b32.xlu0 %v614, 21
        %v970 = vpop.permute.xlu0 %969
        %971 = vrot.lane.b32.xlu0 %v626, 21
        %v972 = vpop.permute.xlu0 %971
        %973 = vrot.lane.b32.xlu0 %v638, 21
        %v974 = vpop.permute.xlu0 %973
        %975 = vrot.lane.b32.xlu0 %v650, 21
        %v976 = vpop.permute.xlu0 %975
        %977 = vrot.lane.b32.xlu0 %v662, 21
        %v978 = vpop.permute.xlu0 %977
        %979 = vrot.lane.b32.xlu0 %v753, 21
        %v980 = vpop.permute.xlu0 %979
        %981 = vrot.lane.b32.xlu0 %v482, 21
        %v982 = vpop.permute.xlu0 %981
        %983 = vrot.lane.b32.xlu0 %v702, 24
        %v984 = vpop.permute.xlu0 %983
        %985 = vrot.lane.b32.xlu0 %v705, 24
        %v986 = vpop.permute.xlu0 %985
        %987 = vrot.lane.b32.xlu0 %v708, 24
        %v988 = vpop.permute.xlu0 %987
        %989 = vrot.lane.b32.xlu0 %v711, 24
        %v990 = vpop.permute.xlu0 %989
        %991 = vrot.lane.b32.xlu0 %v714, 24
        %v992 = vpop.permute.xlu0 %991
        %993 = vrot.lane.b32.xlu0 %v717, 24
        %v994 = vpop.permute.xlu0 %993
        %995 = vrot.lane.b32.xlu0 %v720, 24
        %v996 = vpop.permute.xlu0 %995
        %997 = vrot.lane.b32.xlu0 %v723, 24
        %v998 = vpop.permute.xlu0 %997
        %999 = vrot.lane.b32.xlu0 %v726, 24
        %v1000 = vpop.permute.xlu0 %999
        %1001 = vrot.lane.b32.xlu0 %v729, 24
        %v1002 = vpop.permute.xlu0 %1001
        %1003 = vrot.lane.b32.xlu0 %v732, 24
        %v1004 = vpop.permute.xlu0 %1003
        %1005 = vrot.lane.b32.xlu0 %v735, 24
        %v1006 = vpop.permute.xlu0 %1005
        %1007 = vrot.lane.b32.xlu0 %v738, 24
        %v1008 = vpop.permute.xlu0 %1007
        %1009 = vrot.lane.b32.xlu0 %v741, 24
        %v1010 = vpop.permute.xlu0 %1009
        %1011 = vrot.lane.b32.xlu0 %v758, 24
        %v1012 = vpop.permute.xlu0 %1011
        %1013 = vrot.lane.b32.xlu0 %v696, 24
        %v1014 = vpop.permute.xlu0 %1013
        %vm1015 = vcmask 23552
        %v1017 = vsel %vm1015, 0, %v760
        %v1019 = vsel %vm1015, %v442, %v762
        %v1021 = vsel %vm1015, %v443, %v764
        %v1023 = vsel %vm1015, %v444, %v766
        %v1025 = vsel %vm1015, %v445, %v768
        %v1027 = vsel %vm1015, %v446, %v770
        %v1029 = vsel %vm1015, %v447, %v772
        %v1031 = vsel %vm1015, %v448, %v774
        %v1033 = vsel %vm1015, %v449, %v776
        %v1035 = vsel %vm1015, %v450, %v778
        %v1037 = vsel %vm1015, %v451, %v780
        %v1039 = vsel %vm1015, %v452, %v782
        %v1041 = vsel %vm1015, %v453, %v784
        %v1043 = vsel %vm1015, %v454, %v786
        %v1045 = vsel %vm1015, %v455, %v788
        %v1047 = vsel %vm1015, %v456, %v790
        %vm1048 = vcmask 48128
        %v1050 = vsel %vm1048, %v1017, %v792
        %v1052 = vsel %vm1048, %v1019, %v794
        %v1054 = vsel %vm1048, %v1021, %v796
        %v1056 = vsel %vm1048, %v1023, %v798
        %v1058 = vsel %vm1048, %v1025, %v800
        %v1060 = vsel %vm1048, %v1027, %v802
        %v1062 = vsel %vm1048, %v1029, %v804
        %v1064 = vsel %vm1048, %v1031, %v806
        %v1066 = vsel %vm1048, %v1033, %v808
        %v1068 = vsel %vm1048, %v1035, %v810
        %v1070 = vsel %vm1048, %v1037, %v812
        %v1072 = vsel %vm1048, %v1039, %v814
        %v1074 = vsel %vm1048, %v1041, %v816
        %v1076 = vsel %vm1048, %v1043, %v818
        %v1078 = vsel %vm1048, %v1045, %v820
        %v1080 = vsel %vm1048, %v1047, %v822
        %vm1081 = vcmask 72704
        %v1083 = vsel %vm1081, %v1050, %v824
        %v1085 = vsel %vm1081, %v1052, %v826
        %v1087 = vsel %vm1081, %v1054, %v828
        %v1089 = vsel %vm1081, %v1056, %v830
        %v1091 = vsel %vm1081, %v1058, %v832
        %v1093 = vsel %vm1081, %v1060, %v834
        %v1095 = vsel %vm1081, %v1062, %v836
        %v1097 = vsel %vm1081, %v1064, %v838
        %v1099 = vsel %vm1081, %v1066, %v840
        %v1101 = vsel %vm1081, %v1068, %v842
        %v1103 = vsel %vm1081, %v1070, %v844
        %v1105 = vsel %vm1081, %v1072, %v846
        %v1107 = vsel %vm1081, %v1074, %v848
        %v1109 = vsel %vm1081, %v1076, %v850
        %v1111 = vsel %vm1081, %v1078, %v852
        %v1113 = vsel %vm1081, %v1080, %v854
        %vm1114 = vcmask 97280
        %v1116 = vsel %vm1114, %v1083, %v856
        %v1118 = vsel %vm1114, %v1085, %v858
        %v1120 = vsel %vm1114, %v1087, %v860
        %v1122 = vsel %vm1114, %v1089, %v862
        %v1124 = vsel %vm1114, %v1091, %v864
        %v1126 = vsel %vm1114, %v1093, %v866
        %v1128 = vsel %vm1114, %v1095, %v868
        %v1130 = vsel %vm1114, %v1097, %v870
        %v1132 = vsel %vm1114, %v1099, %v872
        %v1134 = vsel %vm1114, %v1101, %v874
        %v1136 = vsel %vm1114, %v1103, %v876
        %v1138 = vsel %vm1114, %v1105, %v878
        %v1140 = vsel %vm1114, %v1107, %v880
        %v1142 = vsel %vm1114, %v1109, %v882
        %v1144 = vsel %vm1114, %v1111, %v884
        %v1146 = vsel %vm1114, %v1113, %v886
        %vm1147 = vcmask 121856
        %v1149 = vsel %vm1147, %v1116, %v888
        %v1151 = vsel %vm1147, %v1118, %v890
        %v1153 = vsel %vm1147, %v1120, %v892
        %v1155 = vsel %vm1147, %v1122, %v894
        %v1157 = vsel %vm1147, %v1124, %v896
        %v1159 = vsel %vm1147, %v1126, %v898
        %v1161 = vsel %vm1147, %v1128, %v900
        %v1163 = vsel %vm1147, %v1130, %v902
        %v1165 = vsel %vm1147, %v1132, %v904
        %v1167 = vsel %vm1147, %v1134, %v906
        %v1169 = vsel %vm1147, %v1136, %v908
        %v1171 = vsel %vm1147, %v1138, %v910
        %v1173 = vsel %vm1147, %v1140, %v912
        %v1175 = vsel %vm1147, %v1142, %v914
        %v1177 = vsel %vm1147, %v1144, %v916
        %v1179 = vsel %vm1147, %v1146, %v918
        %vm1180 = vcmask 146432
        %v1182 = vsel %vm1180, %v1149, %v920
        %v1184 = vsel %vm1180, %v1151, %v922
        %v1186 = vsel %vm1180, %v1153, %v924
        %v1188 = vsel %vm1180, %v1155, %v926
        %v1190 = vsel %vm1180, %v1157, %v928
        %v1192 = vsel %vm1180, %v1159, %v930
        %v1194 = vsel %vm1180, %v1161, %v932
        %v1196 = vsel %vm1180, %v1163, %v934
        %v1198 = vsel %vm1180, %v1165, %v936
        %v1200 = vsel %vm1180, %v1167, %v938
        %v1202 = vsel %vm1180, %v1169, %v940
        %v1204 = vsel %vm1180, %v1171, %v942
        %v1206 = vsel %vm1180, %v1173, %v944
        %v1208 = vsel %vm1180, %v1175, %v946
        %v1210 = vsel %vm1180, %v1177, %v948
        %v1212 = vsel %vm1180, %v1179, %v950
        %vm1213 = vcmask 171008
        %v1215 = vsel %vm1213, %v1182, %v952
        %v1217 = vsel %vm1213, %v1184, %v954
        %v1219 = vsel %vm1213, %v1186, %v956
        %v1221 = vsel %vm1213, %v1188, %v958
        %v1223 = vsel %vm1213, %v1190, %v960
        %v1225 = vsel %vm1213, %v1192, %v962
        %v1227 = vsel %vm1213, %v1194, %v964
        %v1229 = vsel %vm1213, %v1196, %v966
        %v1231 = vsel %vm1213, %v1198, %v968
        %v1233 = vsel %vm1213, %v1200, %v970
        %v1235 = vsel %vm1213, %v1202, %v972
        %v1237 = vsel %vm1213, %v1204, %v974
        %v1239 = vsel %vm1213, %v1206, %v976
        %v1241 = vsel %vm1213, %v1208, %v978
        %v1243 = vsel %vm1213, %v1210, %v980
        %v1245 = vsel %vm1213, %v1212, %v982
        %vm1246 = vcmask 195584
        %v1248 = vsel %vm1246, %v1215, %v984
        %v1250 = vsel %vm1246, %v1217, %v986
        %v1252 = vsel %vm1246, %v1219, %v988
        %v1254 = vsel %vm1246, %v1221, %v990
        %v1256 = vsel %vm1246, %v1223, %v992
        %v1258 = vsel %vm1246, %v1225, %v994
        %v1260 = vsel %vm1246, %v1227, %v996
        %v1262 = vsel %vm1246, %v1229, %v998
        %v1264 = vsel %vm1246, %v1231, %v1000
        %v1266 = vsel %vm1246, %v1233, %v1002
        %v1268 = vsel %vm1246, %v1235, %v1004
        %v1270 = vsel %vm1246, %v1237, %v1006
        %v1272 = vsel %vm1246, %v1239, %v1008
        %v1274 = vsel %vm1246, %v1241, %v1010
        %v1276 = vsel %vm1246, %v1243, %v1012
        %v1278 = vsel %vm1246, %v1245, %v1014
        %v1279 = vld [vmem:[%s1] sm:$0xf]
        %v1280 = vld [vmem:[%s1 + $0x4] sm:$0xf]
        %v1281 = vld [vmem:[%s1 + $0x8] sm:$0xf]
        %v1282 = vld [vmem:[%s1 + $0xc] sm:$0x3]
        %v1287 = vunpack.c.l.b16 %v1279
        %v1288 = vunpack.c.l.b16 %v1280
        %v1289 = vunpack.c.l.b16 %v1281
        %v1290 = vunpack.c.l.b16 %v1282
        %v1291 = vpack.c.b16 %v1288, %v1287
        %v1292 = vpack.c.b16 %v1290, %v1289
        %vm1294 = vcmask 220160
        %v1295 = vsel %vm1294, %v1248, 0
        %v1297 = vsel %vm1294, %v1250, 0
        %v1299 = vsel %vm1294, %v1252, 0
        %v1301 = vsel %vm1294, %v1254, 0
        %v1303 = vsel %vm1294, %v1256, 0
        %v1305 = vsel %vm1294, %v1258, 0
        %v1307 = vsel %vm1294, %v1260, 0
        %v1309 = vsel %vm1294, %v1262, 0
        %v1311 = vsel %vm1294, %v1264, 0
        %v1313 = vsel %vm1294, %v1266, 0
        %v1315 = vsel %vm1294, %v1268, 0
        %v1317 = vsel %vm1294, %v1270, 0
        %v1319 = vsel %vm1294, %v1272, 0
        %v1321 = vsel %vm1294, %v1274, 0
        %v1323 = vsel %vm1294, %v1276, 0
        %v1325 = vsel %vm1294, %v1278, 0
        %vm1327 = vcmask 1044480
        %vm1328 = vcmask 1045504
        %v1329 = vsel %vm1327, 4294967295, 65535
        %v1330 = vsel %vm1328, %v1329, 0
        %v1332 = vand.u32 %v1292, %v1330
        %1334 = vmatprep.subr.bf16.mxu0 0
        %1335 = vmatpush1.bf16.msra.mxu0 %v1291
        %1336 = vmatprep.subr.bf16.mxu0 0
        %1337 = vmatpush1.bf16.msra.mxu0 %v1332
        %1338 = vmatprep.subr.bf16.mxu0 0
        %1339 = vmatpush1.bf16.msra.mxu0 0
        %1340 = vmatprep.subr.bf16.mxu0 0
        %1341 = vmatpush1.bf16.msra.mxu0 0
        %1342 = vmatprep.subr.bf16.mxu0 0
        %1343 = vmatpush1.bf16.msra.mxu0 0
        %1344 = vmatprep.subr.bf16.mxu0 0
        %1345 = vmatpush1.bf16.msra.mxu0 0
        %1346 = vmatprep.subr.bf16.mxu0 0
        %1347 = vmatpush1.bf16.msra.mxu0 0
        %1348 = vmatprep.subr.bf16.mxu0 0
        %1349 = vmatpush1.bf16.msra.mxu0 0
        %1350 = vmatprep.subr.bf16.mxu0 0
        %1351 = vmatpush1.bf16.msra.mxu0 0
        %1352 = vmatprep.subr.bf16.mxu0 0
        %1353 = vmatpush1.bf16.msra.mxu0 0
        %1354 = vmatprep.subr.bf16.mxu0 0
        %1355 = vmatpush1.bf16.msra.mxu0 0
        %1356 = vmatprep.subr.bf16.mxu0 0
        %1357 = vmatpush1.bf16.msra.mxu0 0
        %1358 = vmatprep.subr.bf16.mxu0 0
        %1359 = vmatpush1.bf16.msra.mxu0 0
        %1360 = vmatprep.subr.bf16.mxu0 0
        %1361 = vmatpush1.bf16.msra.mxu0 0
        %1362 = vmatprep.subr.bf16.mxu0 0
        %1363 = vmatpush1.bf16.msra.mxu0 0
        %1364 = vmatprep.subr.bf16.mxu0 0
        %1365 = vmatpush1.bf16.msra.mxu0 0
        %1366 = vmatprep.mubr.bf16.mxu0 0
        %1367 = vmatmul.mubr.bf16.gmra.mrb[0].mxu0 %v1295
        %v1368 = vpop.f32.mrb[0].mxu0
        %v1369 = vadd.f32 0.0, %v1368
        %v1370 = vpop.f32.mrb[0].mxu0
        %v1371 = vpop.f32.mrb[0].mxu0
        %v1372 = vadd.f32 0.0, %v1371
        %v1373 = vpop.f32.mrb[0].mxu0
        %1374 = vmatprep.mubr.bf16.mxu0 0
        %1375 = vmatmul.mubr.bf16.gmra.mrb[0].mxu0 %v1297
        %v1376 = vpop.f32.mrb[0].mxu0
        %v1377 = vadd.f32 0.0, %v1376
        %v1378 = vpop.f32.mrb[0].mxu0
        %v1379 = vpop.f32.mrb[0].mxu0
        %v1380 = vadd.f32 0.0, %v1379
        %v1381 = vpop.f32.mrb[0].mxu0
        %1382 = vmatprep.mubr.bf16.mxu0 0
        %1383 = vmatmul.mubr.bf16.gmra.mrb[0].mxu0 %v1299
        %v1384 = vpop.f32.mrb[0].mxu0
        %v1385 = vadd.f32 0.0, %v1384
        %v1386 = vpop.f32.mrb[0].mxu0
        %v1387 = vpop.f32.mrb[0].mxu0
        %v1388 = vadd.f32 0.0, %v1387
        %v1389 = vpop.f32.mrb[0].mxu0
        %1390 = vmatprep.mubr.bf16.mxu0 0
        %1391 = vmatmul.mubr.bf16.gmra.mrb[0].mxu0 %v1301
        %v1392 = vpop.f32.mrb[0].mxu0
        %v1393 = vadd.f32 0.0, %v1392
        %v1394 = vpop.f32.mrb[0].mxu0
        %v1395 = vpop.f32.mrb[0].mxu0
        %v1396 = vadd.f32 0.0, %v1395
        %v1397 = vpop.f32.mrb[0].mxu0
        %1398 = vmatprep.mubr.bf16.mxu0 0
        %1399 = vmatmul.mubr.bf16.gmra.mrb[0].mxu0 %v1303
        %v1400 = vpop.f32.mrb[0].mxu0
        %v1401 = vadd.f32 0.0, %v1400
        %v1402 = vpop.f32.mrb[0].mxu0
        %v1403 = vpop.f32.mrb[0].mxu0
        %v1404 = vadd.f32 0.0, %v1403
        %v1405 = vpop.f32.mrb[0].mxu0
        %1406 = vmatprep.mubr.bf16.mxu0 0
        %1407 = vmatmul.mubr.bf16.gmra.mrb[0].mxu0 %v1305
        %v1408 = vpop.f32.mrb[0].mxu0
        %v1409 = vadd.f32 0.0, %v1408
        %v1410 = vpop.f32.mrb[0].mxu0
        %v1411 = vpop.f32.mrb[0].mxu0
        %v1412 = vadd.f32 0.0, %v1411
        %v1413 = vpop.f32.mrb[0].mxu0
        %1414 = vmatprep.mubr.bf16.mxu0 0
        %1415 = vmatmul.mubr.bf16.gmra.mrb[0].mxu0 %v1307
        %v1416 = vpop.f32.mrb[0].mxu0
        %v1417 = vadd.f32 0.0, %v1416
        %v1418 = vpop.f32.mrb[0].mxu0
        %v1419 = vpop.f32.mrb[0].mxu0
        %v1420 = vadd.f32 0.0, %v1419
        %v1421 = vpop.f32.mrb[0].mxu0
        %1422 = vmatprep.mubr.bf16.mxu0 0
        %1423 = vmatmul.mubr.bf16.gmra.mrb[0].mxu0 %v1309
        %v1424 = vpop.f32.mrb[0].mxu0
        %v1425 = vadd.f32 0.0, %v1424
        %v1426 = vpop.f32.mrb[0].mxu0
        %v1427 = vpop.f32.mrb[0].mxu0
        %v1428 = vadd.f32 0.0, %v1427
        %v1429 = vpop.f32.mrb[0].mxu0
        %1430 = vmatprep.mubr.bf16.mxu0 0
        %1431 = vmatmul.mubr.bf16.gmra.mrb[0].mxu0 %v1311
        %v1432 = vpop.f32.mrb[0].mxu0
        %v1433 = vadd.f32 0.0, %v1432
        %v1434 = vpop.f32.mrb[0].mxu0
        %v1435 = vpop.f32.mrb[0].mxu0
        %v1436 = vadd.f32 0.0, %v1435
        %v1437 = vpop.f32.mrb[0].mxu0
        %1438 = vmatprep.mubr.bf16.mxu0 0
        %1439 = vmatmul.mubr.bf16.gmra.mrb[0].mxu0 %v1313
        %v1440 = vpop.f32.mrb[0].mxu0
        %v1441 = vadd.f32 0.0, %v1440
        %v1442 = vpop.f32.mrb[0].mxu0
        %v1443 = vpop.f32.mrb[0].mxu0
        %v1444 = vadd.f32 0.0, %v1443
        %v1445 = vpop.f32.mrb[0].mxu0
        %1446 = vmatprep.mubr.bf16.mxu0 0
        %1447 = vmatmul.mubr.bf16.gmra.mrb[0].mxu0 %v1315
        %v1448 = vpop.f32.mrb[0].mxu0
        %v1449 = vadd.f32 0.0, %v1448
        %v1450 = vpop.f32.mrb[0].mxu0
        %v1451 = vpop.f32.mrb[0].mxu0
        %v1452 = vadd.f32 0.0, %v1451
        %v1453 = vpop.f32.mrb[0].mxu0
        %1454 = vmatprep.mubr.bf16.mxu0 0
        %1455 = vmatmul.mubr.bf16.gmra.mrb[0].mxu0 %v1317
        %v1456 = vpop.f32.mrb[0].mxu0
        %v1457 = vadd.f32 0.0, %v1456
        %v1458 = vpop.f32.mrb[0].mxu0
        %v1459 = vpop.f32.mrb[0].mxu0
        %v1460 = vadd.f32 0.0, %v1459
        %v1461 = vpop.f32.mrb[0].mxu0
        %1462 = vmatprep.mubr.bf16.mxu0 0
        %1463 = vmatmul.mubr.bf16.gmra.mrb[0].mxu0 %v1319
        %v1464 = vpop.f32.mrb[0].mxu0
        %v1465 = vadd.f32 0.0, %v1464
        %v1466 = vpop.f32.mrb[0].mxu0
        %v1467 = vpop.f32.mrb[0].mxu0
        %v1468 = vadd.f32 0.0, %v1467
        %v1469 = vpop.f32.mrb[0].mxu0
        %1470 = vmatprep.mubr.bf16.mxu0 0
        %1471 = vmatmul.mubr.bf16.gmra.mrb[0].mxu0 %v1321
        %v1472 = vpop.f32.mrb[0].mxu0
        %v1473 = vadd.f32 0.0, %v1472
        %v1474 = vpop.f32.mrb[0].mxu0
        %v1475 = vpop.f32.mrb[0].mxu0
        %v1476 = vadd.f32 0.0, %v1475
        %v1477 = vpop.f32.mrb[0].mxu0
        %1478 = vmatprep.mubr.bf16.mxu0 0
        %1479 = vmatmul.mubr.bf16.gmra.mrb[0].mxu0 %v1323
        %v1480 = vpop.f32.mrb[0].mxu0
        %v1481 = vadd.f32 0.0, %v1480
        %v1482 = vpop.f32.mrb[0].mxu0
        %v1483 = vpop.f32.mrb[0].mxu0
        %v1484 = vadd.f32 0.0, %v1483
        %v1485 = vpop.f32.mrb[0].mxu0
        %1486 = vmatprep.mubr.bf16.mxu0 0
        %1487 = vmatmul.mubr.bf16.gmra.mrb[0].mxu0 %v1325
        %v1488 = vpop.f32.mrb[0].mxu0
        %v1489 = vadd.f32 0.0, %v1488
        %v1490 = vpop.f32.mrb[0].mxu0
        %v1491 = vpop.f32.mrb[0].mxu0
        %v1492 = vadd.f32 0.0, %v1491
        %v1493 = vpop.f32.mrb[0].mxu0
        %1494 = vdwg.mxu0
        %v1495 = vpack.c.bf16 %v1372, %v1369
        %v1496 = vpack.c.bf16 %v1380, %v1377
        %v1497 = vpack.c.bf16 %v1388, %v1385
        %v1498 = vpack.c.bf16 %v1396, %v1393
        %v1499 = vpack.c.bf16 %v1404, %v1401
        %v1500 = vpack.c.bf16 %v1412, %v1409
        %v1501 = vpack.c.bf16 %v1420, %v1417
        %v1502 = vpack.c.bf16 %v1428, %v1425
        %v1503 = vpack.c.bf16 %v1436, %v1433
        %v1504 = vpack.c.bf16 %v1444, %v1441
        %v1505 = vpack.c.bf16 %v1452, %v1449
        %v1506 = vpack.c.bf16 %v1460, %v1457
        %v1507 = vpack.c.bf16 %v1468, %v1465
        %v1508 = vpack.c.bf16 %v1476, %v1473
        %v1509 = vpack.c.bf16 %v1484, %v1481
        %v1510 = vpack.c.bf16 %v1492, %v1489
        %v1527 = vunpack.c.l.b16 %v1495
        %v1528 = vunpack.c.h.b16 %v1495
        %v1529 = vunpack.c.l.b16 %v1496
        %v1530 = vunpack.c.h.b16 %v1496
        %v1531 = vunpack.c.l.b16 %v1497
        %v1532 = vunpack.c.h.b16 %v1497
        %v1533 = vunpack.c.l.b16 %v1498
        %v1534 = vunpack.c.h.b16 %v1498
        %v1535 = vunpack.c.l.b16 %v1499
        %v1536 = vunpack.c.h.b16 %v1499
        %v1537 = vunpack.c.l.b16 %v1500
        %v1538 = vunpack.c.h.b16 %v1500
        %v1539 = vunpack.c.l.b16 %v1501
        %v1540 = vunpack.c.h.b16 %v1501
        %v1541 = vunpack.c.l.b16 %v1502
        %v1542 = vunpack.c.h.b16 %v1502
        %v1543 = vunpack.c.l.b16 %v1503
        %v1544 = vunpack.c.h.b16 %v1503
        %v1545 = vunpack.c.l.b16 %v1504
        %v1546 = vunpack.c.h.b16 %v1504
        %v1547 = vunpack.c.l.b16 %v1505
        %v1548 = vunpack.c.h.b16 %v1505
        %v1549 = vunpack.c.l.b16 %v1506
        %v1550 = vunpack.c.h.b16 %v1506
        %v1551 = vunpack.c.l.b16 %v1507
        %v1552 = vunpack.c.h.b16 %v1507
        %v1553 = vunpack.c.l.b16 %v1508
        %v1554 = vunpack.c.h.b16 %v1508
        %v1555 = vunpack.c.l.b16 %v1509
        %v1556 = vunpack.c.h.b16 %v1509
        %v1557 = vunpack.c.l.b16 %v1510
        %v1558 = vunpack.c.h.b16 %v1510
        %v1559 = vpack.c.b16 %v1527, %v1527
        %v1560 = vpack.c.b16 %v1528, %v1528
        %v1561 = vpack.c.b16 %v1529, %v1529
        %v1562 = vpack.c.b16 %v1530, %v1530
        %v1563 = vpack.c.b16 %v1531, %v1531
        %v1564 = vpack.c.b16 %v1532, %v1532
        %v1565 = vpack.c.b16 %v1533, %v1533
        %v1566 = vpack.c.b16 %v1534, %v1534
        %v1567 = vpack.c.b16 %v1535, %v1535
        %v1568 = vpack.c.b16 %v1536, %v1536
        %v1569 = vpack.c.b16 %v1537, %v1537
        %v1570 = vpack.c.b16 %v1538, %v1538
        %v1571 = vpack.c.b16 %v1539, %v1539
        %v1572 = vpack.c.b16 %v1540, %v1540
        %v1573 = vpack.c.b16 %v1541, %v1541
        %v1574 = vpack.c.b16 %v1542, %v1542
        %v1575 = vpack.c.b16 %v1543, %v1543
        %v1576 = vpack.c.b16 %v1544, %v1544
        %v1577 = vpack.c.b16 %v1545, %v1545
        %v1578 = vpack.c.b16 %v1546, %v1546
        %v1579 = vpack.c.b16 %v1547, %v1547
        %v1580 = vpack.c.b16 %v1548, %v1548
        %v1581 = vpack.c.b16 %v1549, %v1549
        %v1582 = vpack.c.b16 %v1550, %v1550
        %v1583 = vpack.c.b16 %v1551, %v1551
        %v1584 = vpack.c.b16 %v1552, %v1552
        %v1585 = vpack.c.b16 %v1553, %v1553
        %v1586 = vpack.c.b16 %v1554, %v1554
        %v1587 = vpack.c.b16 %v1555, %v1555
        %v1588 = vpack.c.b16 %v1556, %v1556
        %v1589 = vpack.c.b16 %v1557, %v1557
        %v1590 = vpack.c.b16 %v1558, %v1558
        %vm1623 = vcmask 257024
        %1624 = vst.msk [vmem:[%s181] sm:$0xf] %vm1623, %v1559
        %1625 = vst.msk [vmem:[%s181 + $0x4] sm:$0xf] %vm1623, %v1560
        %1626 = vst.msk [vmem:[%s181 + $0x8] sm:$0xf] %vm1623, %v1561
        %1627 = vst.msk [vmem:[%s181 + $0xc] sm:$0xf] %vm1623, %v1562
        %1628 = vst.msk [vmem:[%s181 + $0x10] sm:$0xf] %vm1623, %v1563
        %1629 = vst.msk [vmem:[%s181 + $0x14] sm:$0xf] %vm1623, %v1564
        %1630 = vst.msk [vmem:[%s181 + $0x18] sm:$0xf] %vm1623, %v1565
        %1631 = vst.msk [vmem:[%s181 + $0x1c] sm:$0xf] %vm1623, %v1566
        %1632 = vst.msk [vmem:[%s181 + $0x20] sm:$0xf] %vm1623, %v1567
        %1633 = vst.msk [vmem:[%s181 + $0x24] sm:$0xf] %vm1623, %v1568
        %1634 = vst.msk [vmem:[%s181 + $0x28] sm:$0xf] %vm1623, %v1569
        %1635 = vst.msk [vmem:[%s181 + $0x2c] sm:$0xf] %vm1623, %v1570
        %1636 = vst.msk [vmem:[%s181 + $0x30] sm:$0xf] %vm1623, %v1571
        %1637 = vst.msk [vmem:[%s181 + $0x34] sm:$0xf] %vm1623, %v1572
        %1638 = vst.msk [vmem:[%s181 + $0x38] sm:$0xf] %vm1623, %v1573
        %1639 = vst.msk [vmem:[%s181 + $0x3c] sm:$0xf] %vm1623, %v1574
        %1640 = vst.msk [vmem:[%s181 + $0x40] sm:$0xf] %vm1623, %v1575
        %1641 = vst.msk [vmem:[%s181 + $0x44] sm:$0xf] %vm1623, %v1576
        %1642 = vst.msk [vmem:[%s181 + $0x48] sm:$0xf] %vm1623, %v1577
        %1643 = vst.msk [vmem:[%s181 + $0x4c] sm:$0xf] %vm1623, %v1578
        %1644 = vst.msk [vmem:[%s181 + $0x50] sm:$0xf] %vm1623, %v1579
        %1645 = vst.msk [vmem:[%s181 + $0x54] sm:$0xf] %vm1623, %v1580
        %1646 = vst.msk [vmem:[%s181 + $0x58] sm:$0xf] %vm1623, %v1581
        %1647 = vst.msk [vmem:[%s181 + $0x5c] sm:$0xf] %vm1623, %v1582
        %1648 = vst.msk [vmem:[%s181 + $0x60] sm:$0xf] %vm1623, %v1583
        %1649 = vst.msk [vmem:[%s181 + $0x64] sm:$0xf] %vm1623, %v1584
        %1650 = vst.msk [vmem:[%s181 + $0x68] sm:$0xf] %vm1623, %v1585
        %1651 = vst.msk [vmem:[%s181 + $0x6c] sm:$0xf] %vm1623, %v1586
        %1652 = vst.msk [vmem:[%s181 + $0x70] sm:$0xf] %vm1623, %v1587
        %1653 = vst.msk [vmem:[%s181 + $0x74] sm:$0xf] %vm1623, %v1588
        %1654 = vst.msk [vmem:[%s181 + $0x78] sm:$0xf] %vm1623, %v1589
        %1655 = vst.msk [vmem:[%s181 + $0x7c] sm:$0xf] %vm1623, %v1590
        %vm1656 = vcmask 261120
        %v1657 = vsel %vm1656, %v1369, 0.0
        %v1658 = vsel %vm1656, %v1372, 0.0
        %v1659 = vadd.f32 %v1657, %v1658
        %v1660 = vsel %vm1656, %v1377, 0.0
        %v1661 = vadd.f32 %v1659, %v1660
        %v1662 = vsel %vm1656, %v1380, 0.0
        %v1663 = vadd.f32 %v1661, %v1662
        %v1664 = vsel %vm1656, %v1385, 0.0
        %v1665 = vadd.f32 %v1663, %v1664
        %v1666 = vsel %vm1656, %v1388, 0.0
        %v1667 = vadd.f32 %v1665, %v1666
        %v1668 = vsel %vm1656, %v1393, 0.0
        %v1669 = vadd.f32 %v1667, %v1668
        %v1670 = vsel %vm1656, %v1396, 0.0
        %v1671 = vadd.f32 %v1669, %v1670
        %v1672 = vsel %vm1656, %v1401, 0.0
        %v1673 = vadd.f32 %v1671, %v1672
        %v1674 = vsel %vm1656, %v1404, 0.0
        %v1675 = vadd.f32 %v1673, %v1674
        %v1676 = vsel %vm1656, %v1409, 0.0
        %v1677 = vadd.f32 %v1675, %v1676
        %v1678 = vsel %vm1656, %v1412, 0.0
        %v1679 = vadd.f32 %v1677, %v1678
        %v1680 = vsel %vm1656, %v1417, 0.0
        %v1681 = vadd.f32 %v1679, %v1680
        %v1682 = vsel %vm1656, %v1420, 0.0
        %v1683 = vadd.f32 %v1681, %v1682
        %v1684 = vsel %vm1656, %v1425, 0.0
        %v1685 = vadd.f32 %v1683, %v1684
        %v1686 = vsel %vm1656, %v1428, 0.0
        %v1687 = vadd.f32 %v1685, %v1686
        %v1688 = vsel %vm1656, %v1433, 0.0
        %v1689 = vadd.f32 %v1687, %v1688
        %v1690 = vsel %vm1656, %v1436, 0.0
        %v1691 = vadd.f32 %v1689, %v1690
        %v1692 = vsel %vm1656, %v1441, 0.0
        %v1693 = vadd.f32 %v1691, %v1692
        %v1694 = vsel %vm1656, %v1444, 0.0
        %v1695 = vadd.f32 %v1693, %v1694
        %v1696 = vsel %vm1656, %v1449, 0.0
        %v1697 = vadd.f32 %v1695, %v1696
        %v1698 = vsel %vm1656, %v1452, 0.0
        %v1699 = vadd.f32 %v1697, %v1698
        %v1700 = vsel %vm1656, %v1457, 0.0
        %v1701 = vadd.f32 %v1699, %v1700
        %v1702 = vsel %vm1656, %v1460, 0.0
        %v1703 = vadd.f32 %v1701, %v1702
        %v1704 = vsel %vm1656, %v1465, 0.0
        %v1705 = vadd.f32 %v1703, %v1704
        %v1706 = vsel %vm1656, %v1468, 0.0
        %v1707 = vadd.f32 %v1705, %v1706
        %v1708 = vsel %vm1656, %v1473, 0.0
        %v1709 = vadd.f32 %v1707, %v1708
        %v1710 = vsel %vm1656, %v1476, 0.0
        %v1711 = vadd.f32 %v1709, %v1710
        %v1712 = vsel %vm1656, %v1481, 0.0
        %v1713 = vadd.f32 %v1711, %v1712
        %v1714 = vsel %vm1656, %v1484, 0.0
        %v1715 = vadd.f32 %v1713, %v1714
        %v1716 = vsel %vm1656, %v1489, 0.0
        %v1717 = vadd.f32 %v1715, %v1716
        %v1718 = vsel %vm1656, %v1492, 0.0
        %v1719 = vadd.f32 %v1717, %v1718
        %v1720 = vrot.slane %v1719, 4
        %v1721 = vadd.f32 %v1719, %v1720
        %v1722 = vrot.slane %v1721, 2
        %v1723 = vadd.f32 %v1721, %v1722
        %v1724 = vrot.slane %v1723, 1
        %v1725 = vadd.f32 %v1723, %v1724
        %v1726 = vmul.f32 %v1369, %v1369
        %v1727 = vmul.f32 %v1372, %v1372
        %v1728 = vmul.f32 %v1377, %v1377
        %v1729 = vmul.f32 %v1380, %v1380
        %v1730 = vmul.f32 %v1385, %v1385
        %v1731 = vmul.f32 %v1388, %v1388
        %v1732 = vmul.f32 %v1393, %v1393
        %v1733 = vmul.f32 %v1396, %v1396
        %v1734 = vmul.f32 %v1401, %v1401
        %v1735 = vmul.f32 %v1404, %v1404
        %v1736 = vmul.f32 %v1409, %v1409
        %v1737 = vmul.f32 %v1412, %v1412
        %v1738 = vmul.f32 %v1417, %v1417
        %v1739 = vmul.f32 %v1420, %v1420
        %v1740 = vmul.f32 %v1425, %v1425
        %v1741 = vmul.f32 %v1428, %v1428
        %v1742 = vmul.f32 %v1433, %v1433
        %v1743 = vmul.f32 %v1436, %v1436
        %v1744 = vmul.f32 %v1441, %v1441
        %v1745 = vmul.f32 %v1444, %v1444
        %v1746 = vmul.f32 %v1449, %v1449
        %v1747 = vmul.f32 %v1452, %v1452
        %v1748 = vmul.f32 %v1457, %v1457
        %v1749 = vmul.f32 %v1460, %v1460
        %v1750 = vmul.f32 %v1465, %v1465
        %v1751 = vmul.f32 %v1468, %v1468
        %v1752 = vmul.f32 %v1473, %v1473
        %v1753 = vmul.f32 %v1476, %v1476
        %v1754 = vmul.f32 %v1481, %v1481
        %v1755 = vmul.f32 %v1484, %v1484
        %v1756 = vmul.f32 %v1489, %v1489
        %v1757 = vmul.f32 %v1492, %v1492
        %v1758 = vsel %vm1656, %v1726, 0.0
        %v1759 = vsel %vm1656, %v1727, 0.0
        %v1760 = vadd.f32 %v1758, %v1759
        %v1761 = vsel %vm1656, %v1728, 0.0
        %v1762 = vadd.f32 %v1760, %v1761
        %v1763 = vsel %vm1656, %v1729, 0.0
        %v1764 = vadd.f32 %v1762, %v1763
        %v1765 = vsel %vm1656, %v1730, 0.0
        %v1766 = vadd.f32 %v1764, %v1765
        %v1767 = vsel %vm1656, %v1731, 0.0
        %v1768 = vadd.f32 %v1766, %v1767
        %v1769 = vsel %vm1656, %v1732, 0.0
        %v1770 = vadd.f32 %v1768, %v1769
        %v1771 = vsel %vm1656, %v1733, 0.0
        %v1772 = vadd.f32 %v1770, %v1771
        %v1773 = vsel %vm1656, %v1734, 0.0
        %v1774 = vadd.f32 %v1772, %v1773
        %v1775 = vsel %vm1656, %v1735, 0.0
        %v1776 = vadd.f32 %v1774, %v1775
        %v1777 = vsel %vm1656, %v1736, 0.0
        %v1778 = vadd.f32 %v1776, %v1777
        %v1779 = vsel %vm1656, %v1737, 0.0
        %v1780 = vadd.f32 %v1778, %v1779
        %v1781 = vsel %vm1656, %v1738, 0.0
        %v1782 = vadd.f32 %v1780, %v1781
        %v1783 = vsel %vm1656, %v1739, 0.0
        %v1784 = vadd.f32 %v1782, %v1783
        %v1785 = vsel %vm1656, %v1740, 0.0
        %v1786 = vadd.f32 %v1784, %v1785
        %v1787 = vsel %vm1656, %v1741, 0.0
        %v1788 = vadd.f32 %v1786, %v1787
        %v1789 = vsel %vm1656, %v1742, 0.0
        %v1790 = vadd.f32 %v1788, %v1789
        %v1791 = vsel %vm1656, %v1743, 0.0
        %v1792 = vadd.f32 %v1790, %v1791
        %v1793 = vsel %vm1656, %v1744, 0.0
        %v1794 = vadd.f32 %v1792, %v1793
        %v1795 = vsel %vm1656, %v1745, 0.0
        %v1796 = vadd.f32 %v1794, %v1795
        %v1797 = vsel %vm1656, %v1746, 0.0
        %v1798 = vadd.f32 %v1796, %v1797
        %v1799 = vsel %vm1656, %v1747, 0.0
        %v1800 = vadd.f32 %v1798, %v1799
        %v1801 = vsel %vm1656, %v1748, 0.0
        %v1802 = vadd.f32 %v1800, %v1801
        %v1803 = vsel %vm1656, %v1749, 0.0
        %v1804 = vadd.f32 %v1802, %v1803
        %v1805 = vsel %vm1656, %v1750, 0.0
        %v1806 = vadd.f32 %v1804, %v1805
        %v1807 = vsel %vm1656, %v1751, 0.0
        %v1808 = vadd.f32 %v1806, %v1807
        %v1809 = vsel %vm1656, %v1752, 0.0
        %v1810 = vadd.f32 %v1808, %v1809
        %v1811 = vsel %vm1656, %v1753, 0.0
        %v1812 = vadd.f32 %v1810, %v1811
        %v1813 = vsel %vm1656, %v1754, 0.0
        %v1814 = vadd.f32 %v1812, %v1813
        %v1815 = vsel %vm1656, %v1755, 0.0
        %v1816 = vadd.f32 %v1814, %v1815
        %v1817 = vsel %vm1656, %v1756, 0.0
        %v1818 = vadd.f32 %v1816, %v1817
        %v1819 = vsel %vm1656, %v1757, 0.0
        %v1820 = vadd.f32 %v1818, %v1819
        %v1821 = vrot.slane %v1820, 4
        %v1822 = vadd.f32 %v1820, %v1821
        %v1823 = vrot.slane %v1822, 2
        %v1824 = vadd.f32 %v1822, %v1823
        %v1825 = vrot.slane %v1824, 1
        %v1826 = vadd.f32 %v1824, %v1825
        %vm1827 = vcmask 1040384
        %v1828 = vsel %vm1827, %v1725, %v1826
        %vm1829 = vcmask 1041408
        %v1830 = vsel %vm1829, %v1828, 0.0
        %1831 = vst.msk [vmem:[%s171] sm:$0xff] %vm1656, %v1830
        %p1832 = scmp.lt.s32.totalorder %s18, 1
        %s1833 = scalar_select %p1832, %s18, 1
        %s1834 = smul.addr %s1833, 32
        %s1835 = smul.addr %s1834, 4
        %s1836 = scalar_lea.vmem %s2, %s1835
        %s1837 = sand.u32 %s99, 1
        %s1838 = scalar_lea.sflag [#allocation3], %s1837
        %s1839 = sand.u32 %s99, 1
        %s1840 = smul.addr %s1839, 8
        %s1841 = scalar_lea.vmem [#allocation2], %s1840
        // Predicated region
        $region29: #{tpu_custom_call.1} parent=27 // pred_check
          %p1842 = pneg %p83
        $region30: #{tpu_custom_call.1} parent=27 // pred_check_branch
          %1844 = sbr.rel (%p1842) target = $region32
        $region31: #{tpu_custom_call.1} parent=27 // pred_region
          _
        $region32: #{tpu_custom_call.1} parent=27 // pred_fallthru
          _
        // Predicated region
        $region33: #{tpu_custom_call.1} parent=27 // pred_check
          %p1845 = pneg %p109
        $region34: #{tpu_custom_call.1} parent=27 // pred_check_branch
          %1847 = sbr.rel (%p1845) target = $region36
        $region35: #{tpu_custom_call.1} parent=27 // pred_region
          %s1849 = ssub.s32 128, 128
          %1850 = vsyncadd %s1838, %s1849
          %s1851 = smul.addr %s18, 128
          %s1852 = scalar_lea.hbm %s3, %s1851
          %s1854 = sshll.u32 %s1841, 4
          %s1855 = int_to_ptr.vmem [resolvable:$true] %s1854
          %1857 = dma.vmem_to_hbm [thread:$0]  %s1855, 128, %s1852, %s1838
        $region36: #{tpu_custom_call.1} parent=27 // pred_fallthru
          _
      $region28: #{tpu_custom_call.1} parent=5 // pred_fallthru
        _
      %p1858 = scmp.le.s32.totalorder 2, %s13
      // Predicated region
      $region37: #{tpu_custom_call.1} parent=5 // pred_check
        %p1859 = pneg %p1858
      $region38: #{tpu_custom_call.1} parent=5 // pred_check_branch
        %1861 = sbr.rel (%p1859) target = $region40
      $region39: #{tpu_custom_call.1} parent=5 // pred_region
        %s1862 = ssub.s32 %s13, 2
        // Predicated region
        $region41: #{tpu_custom_call.1} parent=39 // pred_check
          %p1863 = pneg %p89
        $region42: #{tpu_custom_call.1} parent=39 // pred_check_branch
          %1865 = sbr.rel (%p1863) target = $region44
        $region43: #{tpu_custom_call.1} parent=39 // pred_region
          %p1866 = scmp.lt.s32.totalorder %s19, 1
          %s1867 = scalar_select %p1866, %s19, 1
          %s1868 = smul.addr %s1867, 32
          %s1869 = smul.addr %s1868, 4
          %s1870 = scalar_lea.vmem %s2, %s1869
        $region44: #{tpu_custom_call.1} parent=39 // pred_fallthru
          _
        // Predicated region
        $region45: #{tpu_custom_call.1} parent=39 // pred_check
          %p1871 = pneg %p115
        $region46: #{tpu_custom_call.1} parent=39 // pred_check_branch
          %1873 = sbr.rel (%p1871) target = $region48
        $region47: #{tpu_custom_call.1} parent=39 // pred_region
          %s1874 = sand.u32 %s100, 1
          %s1875 = scalar_lea.sflag [#allocation3], %s1874
          %s1876 = sand.u32 %s100, 1
          %s1877 = smul.addr %s1876, 8
          %s1878 = scalar_lea.vmem [#allocation2], %s1877
          %1879 = dma.done %s1875, 128
        $region48: #{tpu_custom_call.1} parent=39 // pred_fallthru
          _
      $region40: #{tpu_custom_call.1} parent=5 // pred_fallthru
        _
    $region6: #{tpu_custom_call.1} parent=1 // loop_footer
      %s17 = sadd.s32 1, %s13
    $region7: #{tpu_custom_call.1} parent=1 // loop_footer_branch
      %12 = sbr.rel target = $region3
    $region8: #{tpu_custom_call.1} parent=1 // loop_exit
      _
    %1880 = vsyncpa [#allocation3], 1
    %s1881 = scalar_lea.sflag [#allocation3], 1
    %1882 = vsyncpa %s1881, 1

</llo_original>
